<compile_context>
chip_gen: v7x
topology: tpu7x:2x2x1
jax: 0.10.0
libtpu: 0.0.40
codegen_flags: <defaults>
</compile_context>

<pallas_src>
import jax
import jax.numpy as jnp
import numpy as np
from jax.experimental import pallas as pl
from jax.experimental.pallas import tpu as pltpu

LANES = 128
SUBLANES = 8
_VMEM_LIMIT = 32 * 1024 * 1024


def _round_up(x, m):
    return (x + m - 1) // m * m


def _pad_axis(x, axis, target):
    pad = target - x.shape[axis]
    if pad == 0:
        return x
    widths = [(0, 0)] * x.ndim
    widths[axis] = (0, pad)
    return jnp.pad(x, widths)


# ----------------------------------------------------------------------------
# Pallas kernels
# ----------------------------------------------------------------------------
def conv_pool_relu_kernel(p_ref, w_ref, b_ref, o_ref):
    """Fused conv-as-matmul + 2x2 max-pool + bias + ReLU.

    p_ref: (4, TM, K) bf16  im2col patches; leading axis = pool-window member
    w_ref: (K, 128)   bf16  flattened conv weights, Cout zero-padded to 128
    b_ref: (1, 128)   f32   bias (zero-padded)
    o_ref: (TM, 128)  f32   relu(max_i(p_i @ w) + b), lane-dense store
    """
    w = w_ref[...]
    m = jnp.dot(p_ref[0], w, preferred_element_type=jnp.float32)
    for i in range(1, 4):  # static unroll over the 2x2 pool window
        m = jnp.maximum(m, jnp.dot(p_ref[i], w,
                                   preferred_element_type=jnp.float32))
    o_ref[...] = jnp.maximum(m + b_ref[...], 0.0)


def mlp_head_kernel(x_ref, w1_ref, b1_ref, w2_ref, b2_ref, o_ref):
    """Fused fc1 + ReLU + fc2; the hidden activation stays in VMEM/registers."""
    h = jnp.dot(x_ref[...], w1_ref[...], preferred_element_type=jnp.float32)
    h = jnp.maximum(h + b1_ref[...], 0.0)
    y = jnp.dot(h.astype(w2_ref.dtype), w2_ref[...],
                preferred_element_type=jnp.float32)
    o_ref[...] = y + b2_ref[...]


# ----------------------------------------------------------------------------
# pallas_call wrappers
# ----------------------------------------------------------------------------
def conv_pool_relu(patches, w_mat, bias, *, tm=128):
    """patches: (4, M, K) f32; w_mat: (K, N) f32; bias: (N,) -> (M, N) f32."""
    _, M, K = patches.shape
    N = w_mat.shape[1]

    if M <= tm:
        tm = _round_up(M, SUBLANES)      # single full block
    Mp = _round_up(M, tm)
    NP = _round_up(N, LANES)             # lane-dense output

    p = _pad_axis(patches, 1, Mp).astype(jnp.bfloat16)
    w = _pad_axis(w_mat, 1, NP).astype(jnp.bfloat16)
    b = _pad_axis(bias.reshape(1, N), 1, NP).astype(jnp.float32)

    grid = (Mp // tm,)
    cost = pl.CostEstimate(
        flops=2 * 4 * Mp * K * NP,
        transcendentals=0,
        bytes_accessed=p.size * 2 + w.size * 2 + b.size * 4 + Mp * NP * 4,
    )
    out = pl.pallas_call(
        conv_pool_relu_kernel,
        out_shape=jax.ShapeDtypeStruct((Mp, NP), jnp.float32),
        grid=grid,
        in_specs=[
            pl.BlockSpec((4, tm, K), lambda i: (0, i, 0)),
            pl.BlockSpec((K, NP), lambda i: (0, 0)),
            pl.BlockSpec((1, NP), lambda i: (0, 0)),
        ],
        out_specs=pl.BlockSpec((tm, NP), lambda i: (i, 0)),
        compiler_params=pltpu.CompilerParams(
            dimension_semantics=("parallel",),
            vmem_limit_bytes=_VMEM_LIMIT),
        cost_estimate=cost,
    )(p, w, b)
    return out[:M, :N]


def mlp_head(x, w1_mat, b1, w2_mat, b2, *, tb=128):
    """Fused fc1+relu+fc2.  x: (B, F); w1: (F, H); w2: (H, O) -> (B, O)."""
    B, F = x.shape
    H = w1_mat.shape[1]
    O = w2_mat.shape[1]

    if B <= tb:
        tb = _round_up(B, SUBLANES)
    Bp = _round_up(B, tb)
    HP = _round_up(H, LANES)
    OP = _round_up(O, LANES)

    xb = _pad_axis(x, 0, Bp).astype(jnp.bfloat16)
    w1p = _pad_axis(w1_mat, 1, HP).astype(jnp.bfloat16)
    b1p = _pad_axis(b1.reshape(1, H), 1, HP).astype(jnp.float32)
    w2p = _pad_axis(_pad_axis(w2_mat, 0, HP), 1, OP).astype(jnp.bfloat16)
    b2p = _pad_axis(b2.reshape(1, O), 1, OP).astype(jnp.float32)

    grid = (Bp // tb,)
    cost = pl.CostEstimate(
        flops=2 * Bp * F * HP + 2 * Bp * HP * OP,
        transcendentals=0,
        bytes_accessed=(xb.size * 2 + w1p.size * 2 + w2p.size * 2
                        + b1p.size * 4 + b2p.size * 4 + Bp * OP * 4),
    )
    out = pl.pallas_call(
        mlp_head_kernel,
        out_shape=jax.ShapeDtypeStruct((Bp, OP), jnp.float32),
        grid=grid,
        in_specs=[
            pl.BlockSpec((tb, F), lambda i: (i, 0)),
            pl.BlockSpec((F, HP), lambda i: (0, 0)),
            pl.BlockSpec((1, HP), lambda i: (0, 0)),
            pl.BlockSpec((HP, OP), lambda i: (0, 0)),
            pl.BlockSpec((1, OP), lambda i: (0, 0)),
        ],
        out_specs=pl.BlockSpec((tb, OP), lambda i: (i, 0)),
        compiler_params=pltpu.CompilerParams(
            dimension_semantics=("parallel",),
            vmem_limit_bytes=_VMEM_LIMIT),
        cost_estimate=cost,
    )(xb, w1p, b1p, w2p, b2p)
    return out[:B, :O]


# ----------------------------------------------------------------------------
# Glue: channel-last im2col with pool-window grouping (pure JAX, no compute)
# ----------------------------------------------------------------------------
def im2col_pool_groups(x, ksize):
    """x: (B, H, W, C) channel-last -> (4, B*PH*PW, ksize*ksize*C).

    Leading axis enumerates the 2x2 pool-window members (di*2 + dj); row m
    corresponds to pooled output pixel (b, ph, pw); last-axis flatten order
    is (kh, kw, ci), matching w.transpose(2, 3, 1, 0).reshape(-1, Cout).
    """
    B, H, W, C = x.shape
    OH, OW = H - ksize + 1, W - ksize + 1
    PH, PW = OH // 2, OW // 2
    cols = []
    for ki in range(ksize):
        for kj in range(ksize):
            cols.append(x[:, ki:ki + OH, kj:kj + OW, :])      # (B, OH, OW, C)
    patches = jnp.concatenate(cols, axis=-1)                   # (B, OH, OW, k*k*C)
    CKK = ksize * ksize * C
    patches = patches.reshape(B, PH, 2, PW, 2, CKK)
    patches = patches.transpose(2, 4, 0, 1, 3, 5)              # (2, 2, B, PH, PW, CKK)
    return patches.reshape(4, B * PH * PW, CKK), (B, PH, PW)


# ----------------------------------------------------------------------------
# Full forward pass (matches PyTorch SimpleCNN.forward)
# ----------------------------------------------------------------------------
def simple_cnn_forward(x, params):
    """x: (B, 1, 28, 28) NCHW f32.  Returns (B, 10) logits."""
    w1, b1, w2, b2, fw1, fb1, fw2, fb2 = params
    B = x.shape[0]

    # Single entry transpose to channel-last; everything downstream stays NHWC.
    xl = jnp.transpose(x, (0, 2, 3, 1))                        # (B, 28, 28, 1)

    # conv1 (1->10, k=5) + maxpool2 + relu : -> (B, 12, 12, 10)
    p1, (_, PH1, PW1) = im2col_pool_groups(xl, 5)
    w1_mat = jnp.transpose(w1, (2, 3, 1, 0)).reshape(25, 10)   # (kh,kw,ci) x co
    h1 = conv_pool_relu(p1, w1_mat, b1)                        # (B*144, 10)
    h1 = h1.reshape(B, PH1, PW1, 10)

    # conv2 (10->20, k=5) + maxpool2 + relu : -> (B, 4, 4, 20)
    p2, (_, PH2, PW2) = im2col_pool_groups(h1, 5)
    w2_mat = jnp.transpose(w2, (2, 3, 1, 0)).reshape(250, 20)
    h2 = conv_pool_relu(p2, w2_mat, b2)                        # (B*16, 20)
    h2 = h2.reshape(B, PH2, PW2, 20)

    # Flatten channel-last -> (h, w, c) order; reorder fc1 columns (trace-time)
    # from torch's (c, h, w) order so no transpose of the activations is needed.
    flat = h2.reshape(B, 320)
    fw1_r = fw1.reshape(50, 20, PH2, PW2).transpose(0, 2, 3, 1).reshape(50, 320)

    # fused fc1 + relu + fc2
    return mlp_head(flat, fw1_r.T, fb1, fw2.T, fb2)            # (B, 10)


# ----------------------------------------------------------------------------
# Pure-JAX reference (same bf16-operand / f32-accumulate quantization)
# ----------------------------------------------------------------------------
def reference_forward(x, params):
    w1, b1, w2, b2, fw1, fb1, fw2, fb2 = params
    bf = jnp.bfloat16

    def conv(x, w, b):
        y = jax.lax.conv_general_dilated(
            x.astype(bf), w.astype(bf), window_strides=(1, 1), padding="VALID",
            dimension_numbers=("NCHW", "OIHW", "NCHW"),
            preferred_element_type=jnp.float32)
        return y + b[None, :, None, None]

    def maxpool2(x):
        return jax.lax.reduce_window(
            x, -jnp.inf, jax.lax.max, (1, 1, 2, 2), (1, 1, 2, 2), "VALID")

    h = jax.nn.relu(maxpool2(conv(x, w1, b1)))
    h = jax.nn.relu(maxpool2(conv(h, w2, b2)))
    h = h.reshape(h.shape[0], -1)                              # torch (c,h,w) order
    h = jax.nn.relu(jnp.dot(h.astype(bf), fw1.T.astype(bf),
                            preferred_element_type=jnp.float32) + fb1)
    return jnp.dot(h.astype(bf), fw2.T.astype(bf),
                   preferred_element_type=jnp.float32) + fb2


# ----------------------------------------------------------------------------
# main
# ----------------------------------------------------------------------------
if __name__ == "__main__":
    key = jax.random.PRNGKey(0)
    keys = jax.random.split(key, 9)

    # Deterministic synthetic parameters (shapes match nn.Module __init__).
    w1 = jax.random.normal(keys[0], (10, 1, 5, 5), jnp.float32) * 0.1
    b1 = jax.random.normal(keys[1], (10,), jnp.float32) * 0.1
    w2 = jax.random.normal(keys[2], (20, 10, 5, 5), jnp.float32) * 0.05
    b2 = jax.random.normal(keys[3], (20,), jnp.float32) * 0.1
    fw1 = jax.random.normal(keys[4], (50, 320), jnp.float32) * 0.05
    fb1 = jax.random.normal(keys[5], (50,), jnp.float32) * 0.1
    fw2 = jax.random.normal(keys[6], (10, 50), jnp.float32) * 0.1
    fb2 = jax.random.normal(keys[7], (10,), jnp.float32) * 0.1
    params = (w1, b1, w2, b2, fw1, fb1, fw2, fb2)

    # Input: batch=2, MNIST-sized images (the 320-dim fc1 implies 1x28x28).
    x = jax.random.normal(keys[8], (2, 1, 28, 28), jnp.float32)

    fwd = jax.jit(simple_cnn_forward)
    ref_fwd = jax.jit(reference_forward)

    out = jax.block_until_ready(fwd(x, params))
    ref = jax.block_until_ready(ref_fwd(x, params))

    assert out.shape == (2, 10)
    assert np.allclose(np.asarray(out), np.asarray(ref), rtol=2e-2, atol=2e-2)
    print("KERNEL_OK")
</pallas_src>

<mosaic_0001>
module attributes {stable_mosaic.version = 11 : i64} {
  func.func @conv_pool_relu_kernel(%arg0: i32, %arg1: memref<4x128x25xbf16, #tpu.memory_space<vmem>>, %arg2: memref<25x128xbf16, #tpu.memory_space<vmem>>, %arg3: memref<1x128xf32, #tpu.memory_space<vmem>>, %arg4: memref<128x128xf32, #tpu.memory_space<vmem>>) attributes {dimension_semantics = [#tpu.dimension_semantics<parallel>], iteration_bounds = array<i64: 3>, scalar_prefetch = 0 : i64, scratch_operands = 0 : i64, tpu.core_type = #tpu.core_type<tc>, window_params = [{transform_indices = @transform_0, window_bounds = array<i64: 4, 128, 25>}, {pipeline_mode = #tpu.pipeline_mode<synchronous>, transform_indices = @transform_1, window_bounds = array<i64: 25, 128>}, {pipeline_mode = #tpu.pipeline_mode<synchronous>, transform_indices = @transform_2, window_bounds = array<i64: 1, 128>}, {transform_indices = @transform_3, window_bounds = array<i64: 128, 128>}]} {
    %c0 = arith.constant 0 : index
    %c0_0 = arith.constant 0 : index
    %0 = vector.load %arg2[%c0, %c0_0] : memref<25x128xbf16, #tpu.memory_space<vmem>>, vector<25x128xbf16>
    %c0_1 = arith.constant 0 : index
    %c0_2 = arith.constant 0 : index
    %c0_3 = arith.constant 0 : index
    %1 = vector.load %arg1[%c0_1, %c0_2, %c0_3] : memref<4x128x25xbf16, #tpu.memory_space<vmem>>, vector<1x128x25xbf16>
    %2 = vector.shape_cast %1 : vector<1x128x25xbf16> to vector<128x25xbf16>
    %cst = arith.constant dense<0.000000e+00> : vector<128x128xf32>
    %3 = tpu.matmul %2, %0, %cst {dimension_numbers = #tpu.dot_dimension_numbers<[1], [0], [0], [1], [0, 0, 1, 1], [], []>} : vector<128x25xbf16>, vector<25x128xbf16>, vector<128x128xf32> -> vector<128x128xf32>
    %c1 = arith.constant 1 : index
    %c0_4 = arith.constant 0 : index
    %c0_5 = arith.constant 0 : index
    %4 = vector.load %arg1[%c1, %c0_4, %c0_5] : memref<4x128x25xbf16, #tpu.memory_space<vmem>>, vector<1x128x25xbf16>
    %5 = vector.shape_cast %4 : vector<1x128x25xbf16> to vector<128x25xbf16>
    %cst_6 = arith.constant dense<0.000000e+00> : vector<128x128xf32>
    %6 = tpu.matmul %5, %0, %cst_6 {dimension_numbers = #tpu.dot_dimension_numbers<[1], [0], [0], [1], [0, 0, 1, 1], [], []>} : vector<128x25xbf16>, vector<25x128xbf16>, vector<128x128xf32> -> vector<128x128xf32>
    %7 = arith.maximumf %3, %6 : vector<128x128xf32>
    %c2 = arith.constant 2 : index
    %c0_7 = arith.constant 0 : index
    %c0_8 = arith.constant 0 : index
    %8 = vector.load %arg1[%c2, %c0_7, %c0_8] : memref<4x128x25xbf16, #tpu.memory_space<vmem>>, vector<1x128x25xbf16>
    %9 = vector.shape_cast %8 : vector<1x128x25xbf16> to vector<128x25xbf16>
    %cst_9 = arith.constant dense<0.000000e+00> : vector<128x128xf32>
    %10 = tpu.matmul %9, %0, %cst_9 {dimension_numbers = #tpu.dot_dimension_numbers<[1], [0], [0], [1], [0, 0, 1, 1], [], []>} : vector<128x25xbf16>, vector<25x128xbf16>, vector<128x128xf32> -> vector<128x128xf32>
    %11 = arith.maximumf %7, %10 : vector<128x128xf32>
    %c3 = arith.constant 3 : index
    %c0_10 = arith.constant 0 : index
    %c0_11 = arith.constant 0 : index
    %12 = vector.load %arg1[%c3, %c0_10, %c0_11] : memref<4x128x25xbf16, #tpu.memory_space<vmem>>, vector<1x128x25xbf16>
    %13 = vector.shape_cast %12 : vector<1x128x25xbf16> to vector<128x25xbf16>
    %cst_12 = arith.constant dense<0.000000e+00> : vector<128x128xf32>
    %14 = tpu.matmul %13, %0, %cst_12 {dimension_numbers = #tpu.dot_dimension_numbers<[1], [0], [0], [1], [0, 0, 1, 1], [], []>} : vector<128x25xbf16>, vector<25x128xbf16>, vector<128x128xf32> -> vector<128x128xf32>
    %15 = arith.maximumf %11, %14 : vector<128x128xf32>
    %c0_13 = arith.constant 0 : index
    %c0_14 = arith.constant 0 : index
    %16 = vector.load %arg3[%c0_13, %c0_14] : memref<1x128xf32, #tpu.memory_space<vmem>>, vector<1x128xf32>
    %17 = vector.broadcast %16 : vector<1x128xf32> to vector<128x128xf32>
    %18 = arith.addf %15, %17 : vector<128x128xf32>
    %cst_15 = arith.constant 0.000000e+00 : f32
    %19 = vector.broadcast %cst_15 : f32 to vector<128x128xf32>
    %20 = arith.maximumf %18, %19 : vector<128x128xf32>
    %c0_16 = arith.constant 0 : index
    %c0_17 = arith.constant 0 : index
    %21 = vector.load %arg4[%c0_16, %c0_17] : memref<128x128xf32, #tpu.memory_space<vmem>>, vector<128x128xf32>
    tpu.vector_store %arg4[%c0_16, %c0_17], %20 {strides = array<i32>} : memref<128x128xf32, #tpu.memory_space<vmem>>, vector<128x128xf32>,
    return
  }
  func.func @transform_0(%arg0: i32) -> (i32, i32, i32) {
    %c0_i32 = arith.constant 0 : i32
    %c0_i32_0 = arith.constant 0 : i32
    %c0_i32_1 = arith.constant 0 : i32
    return %c0_i32, %arg0, %c0_i32_0 : i32, i32, i32
  }
  func.func @transform_1(%arg0: i32) -> (i32, i32) {
    %c0_i32 = arith.constant 0 : i32
    %c0_i32_0 = arith.constant 0 : i32
    %c0_i32_1 = arith.constant 0 : i32
    return %c0_i32, %c0_i32_0 : i32, i32
  }
  func.func @transform_2(%arg0: i32) -> (i32, i32) {
    %c0_i32 = arith.constant 0 : i32
    %c0_i32_0 = arith.constant 0 : i32
    %c0_i32_1 = arith.constant 0 : i32
    return %c0_i32, %c0_i32_0 : i32, i32
  }
  func.func @transform_3(%arg0: i32) -> (i32, i32) {
    %c0_i32 = arith.constant 0 : i32
    %c0_i32_0 = arith.constant 0 : i32
    return %arg0, %c0_i32 : i32, i32
  }
}

module attributes {stable_mosaic.version = 11 : i64} {
  func.func @conv_pool_relu_kernel(%arg0: i32, %arg1: memref<4x32x250xbf16, #tpu.memory_space<vmem>>, %arg2: memref<250x128xbf16, #tpu.memory_space<vmem>>, %arg3: memref<1x128xf32, #tpu.memory_space<vmem>>, %arg4: memref<32x128xf32, #tpu.memory_space<vmem>>) attributes {dimension_semantics = [#tpu.dimension_semantics<parallel>], iteration_bounds = array<i64: 1>, scalar_prefetch = 0 : i64, scratch_operands = 0 : i64, tpu.core_type = #tpu.core_type<tc>, window_params = [{transform_indices = @transform_0, window_bounds = array<i64: 4, 32, 250>}, {pipeline_mode = #tpu.pipeline_mode<synchronous>, transform_indices = @transform_1, window_bounds = array<i64: 250, 128>}, {pipeline_mode = #tpu.pipeline_mode<synchronous>, transform_indices = @transform_2, window_bounds = array<i64: 1, 128>}, {transform_indices = @transform_3, window_bounds = array<i64: 32, 128>}]} {
    %c0 = arith.constant 0 : index
    %c0_0 = arith.constant 0 : index
    %0 = vector.load %arg2[%c0, %c0_0] : memref<250x128xbf16, #tpu.memory_space<vmem>>, vector<250x128xbf16>
    %c0_1 = arith.constant 0 : index
    %c0_2 = arith.constant 0 : index
    %c0_3 = arith.constant 0 : index
    %1 = vector.load %arg1[%c0_1, %c0_2, %c0_3] : memref<4x32x250xbf16, #tpu.memory_space<vmem>>, vector<1x32x250xbf16>
    %2 = vector.shape_cast %1 : vector<1x32x250xbf16> to vector<32x250xbf16>
    %cst = arith.constant dense<0.000000e+00> : vector<32x128xf32>
    %3 = tpu.matmul %2, %0, %cst {dimension_numbers = #tpu.dot_dimension_numbers<[1], [0], [0], [1], [0, 0, 1, 1], [], []>} : vector<32x250xbf16>, vector<250x128xbf16>, vector<32x128xf32> -> vector<32x128xf32>
    %c1 = arith.constant 1 : index
    %c0_4 = arith.constant 0 : index
    %c0_5 = arith.constant 0 : index
    %4 = vector.load %arg1[%c1, %c0_4, %c0_5] : memref<4x32x250xbf16, #tpu.memory_space<vmem>>, vector<1x32x250xbf16>
    %5 = vector.shape_cast %4 : vector<1x32x250xbf16> to vector<32x250xbf16>
    %cst_6 = arith.constant dense<0.000000e+00> : vector<32x128xf32>
    %6 = tpu.matmul %5, %0, %cst_6 {dimension_numbers = #tpu.dot_dimension_numbers<[1], [0], [0], [1], [0, 0, 1, 1], [], []>} : vector<32x250xbf16>, vector<250x128xbf16>, vector<32x128xf32> -> vector<32x128xf32>
    %7 = arith.maximumf %3, %6 : vector<32x128xf32>
    %c2 = arith.constant 2 : index
    %c0_7 = arith.constant 0 : index
    %c0_8 = arith.constant 0 : index
    %8 = vector.load %arg1[%c2, %c0_7, %c0_8] : memref<4x32x250xbf16, #tpu.memory_space<vmem>>, vector<1x32x250xbf16>
    %9 = vector.shape_cast %8 : vector<1x32x250xbf16> to vector<32x250xbf16>
    %cst_9 = arith.constant dense<0.000000e+00> : vector<32x128xf32>
    %10 = tpu.matmul %9, %0, %cst_9 {dimension_numbers = #tpu.dot_dimension_numbers<[1], [0], [0], [1], [0, 0, 1, 1], [], []>} : vector<32x250xbf16>, vector<250x128xbf16>, vector<32x128xf32> -> vector<32x128xf32>
    %11 = arith.maximumf %7, %10 : vector<32x128xf32>
    %c3 = arith.constant 3 : index
    %c0_10 = arith.constant 0 : index
    %c0_11 = arith.constant 0 : index
    %12 = vector.load %arg1[%c3, %c0_10, %c0_11] : memref<4x32x250xbf16, #tpu.memory_space<vmem>>, vector<1x32x250xbf16>
    %13 = vector.shape_cast %12 : vector<1x32x250xbf16> to vector<32x250xbf16>
    %cst_12 = arith.constant dense<0.000000e+00> : vector<32x128xf32>
    %14 = tpu.matmul %13, %0, %cst_12 {dimension_numbers = #tpu.dot_dimension_numbers<[1], [0], [0], [1], [0, 0, 1, 1], [], []>} : vector<32x250xbf16>, vector<250x128xbf16>, vector<32x128xf32> -> vector<32x128xf32>
    %15 = arith.maximumf %11, %14 : vector<32x128xf32>
    %c0_13 = arith.constant 0 : index
    %c0_14 = arith.constant 0 : index
    %16 = vector.load %arg3[%c0_13, %c0_14] : memref<1x128xf32, #tpu.memory_space<vmem>>, vector<1x128xf32>
    %17 = vector.broadcast %16 : vector<1x128xf32> to vector<32x128xf32>
    %18 = arith.addf %15, %17 : vector<32x128xf32>
    %cst_15 = arith.constant 0.000000e+00 : f32
    %19 = vector.broadcast %cst_15 : f32 to vector<32x128xf32>
    %20 = arith.maximumf %18, %19 : vector<32x128xf32>
    %c0_16 = arith.constant 0 : index
    %c0_17 = arith.constant 0 : index
    %21 = vector.load %arg4[%c0_16, %c0_17] : memref<32x128xf32, #tpu.memory_space<vmem>>, vector<32x128xf32>
    tpu.vector_store %arg4[%c0_16, %c0_17], %20 {strides = array<i32>} : memref<32x128xf32, #tpu.memory_space<vmem>>, vector<32x128xf32>,
    return
  }
  func.func @transform_0(%arg0: i32) -> (i32, i32, i32) {
    %c0_i32 = arith.constant 0 : i32
    %c0_i32_0 = arith.constant 0 : i32
    %c0_i32_1 = arith.constant 0 : i32
    return %c0_i32, %arg0, %c0_i32_0 : i32, i32, i32
  }
  func.func @transform_1(%arg0: i32) -> (i32, i32) {
    %c0_i32 = arith.constant 0 : i32
    %c0_i32_0 = arith.constant 0 : i32
    %c0_i32_1 = arith.constant 0 : i32
    return %c0_i32, %c0_i32_0 : i32, i32
  }
  func.func @transform_2(%arg0: i32) -> (i32, i32) {
    %c0_i32 = arith.constant 0 : i32
    %c0_i32_0 = arith.constant 0 : i32
    %c0_i32_1 = arith.constant 0 : i32
    return %c0_i32, %c0_i32_0 : i32, i32
  }
  func.func @transform_3(%arg0: i32) -> (i32, i32) {
    %c0_i32 = arith.constant 0 : i32
    %c0_i32_0 = arith.constant 0 : i32
    return %arg0, %c0_i32 : i32, i32
  }
}

module attributes {stable_mosaic.version = 11 : i64} {
  func.func @mlp_head_kernel(%arg0: i32, %arg1: memref<8x320xbf16, #tpu.memory_space<vmem>>, %arg2: memref<320x128xbf16, #tpu.memory_space<vmem>>, %arg3: memref<1x128xf32, #tpu.memory_space<vmem>>, %arg4: memref<128x128xbf16, #tpu.memory_space<vmem>>, %arg5: memref<1x128xf32, #tpu.memory_space<vmem>>, %arg6: memref<8x128xf32, #tpu.memory_space<vmem>>) attributes {dimension_semantics = [#tpu.dimension_semantics<parallel>], iteration_bounds = array<i64: 1>, scalar_prefetch = 0 : i64, scratch_operands = 0 : i64, tpu.core_type = #tpu.core_type<tc>, window_params = [{transform_indices = @transform_0, window_bounds = array<i64: 8, 320>}, {pipeline_mode = #tpu.pipeline_mode<synchronous>, transform_indices = @transform_1, window_bounds = array<i64: 320, 128>}, {pipeline_mode = #tpu.pipeline_mode<synchronous>, transform_indices = @transform_2, window_bounds = array<i64: 1, 128>}, {pipeline_mode = #tpu.pipeline_mode<synchronous>, transform_indices = @transform_3, window_bounds = array<i64: 128, 128>}, {pipeline_mode = #tpu.pipeline_mode<synchronous>, transform_indices = @transform_4, window_bounds = array<i64: 1, 128>}, {transform_indices = @transform_5, window_bounds = array<i64: 8, 128>}]} {
    %c0 = arith.constant 0 : index
    %c0_0 = arith.constant 0 : index
    %0 = vector.load %arg1[%c0, %c0_0] : memref<8x320xbf16, #tpu.memory_space<vmem>>, vector<8x320xbf16>
    %c0_1 = arith.constant 0 : index
    %c0_2 = arith.constant 0 : index
    %1 = vector.load %arg2[%c0_1, %c0_2] : memref<320x128xbf16, #tpu.memory_space<vmem>>, vector<320x128xbf16>
    %cst = arith.constant dense<0.000000e+00> : vector<8x128xf32>
    %2 = tpu.matmul %0, %1, %cst {dimension_numbers = #tpu.dot_dimension_numbers<[1], [0], [0], [1], [0, 0, 1, 1], [], []>} : vector<8x320xbf16>, vector<320x128xbf16>, vector<8x128xf32> -> vector<8x128xf32>
    %c0_3 = arith.constant 0 : index
    %c0_4 = arith.constant 0 : index
    %3 = vector.load %arg3[%c0_3, %c0_4] : memref<1x128xf32, #tpu.memory_space<vmem>>, vector<1x128xf32>
    %4 = vector.broadcast %3 : vector<1x128xf32> to vector<8x128xf32>
    %5 = arith.addf %2, %4 : vector<8x128xf32>
    %cst_5 = arith.constant 0.000000e+00 : f32
    %6 = vector.broadcast %cst_5 : f32 to vector<8x128xf32>
    %7 = arith.maximumf %5, %6 : vector<8x128xf32>
    %8 = arith.truncf %7 : vector<8x128xf32> to vector<8x128xbf16>
    %c0_6 = arith.constant 0 : index
    %c0_7 = arith.constant 0 : index
    %9 = vector.load %arg4[%c0_6, %c0_7] : memref<128x128xbf16, #tpu.memory_space<vmem>>, vector<128x128xbf16>
    %cst_8 = arith.constant dense<0.000000e+00> : vector<8x128xf32>
    %10 = tpu.matmul %8, %9, %cst_8 {dimension_numbers = #tpu.dot_dimension_numbers<[1], [0], [0], [1], [0, 0, 1, 1], [], []>} : vector<8x128xbf16>, vector<128x128xbf16>, vector<8x128xf32> -> vector<8x128xf32>
    %c0_9 = arith.constant 0 : index
    %c0_10 = arith.constant 0 : index
    %11 = vector.load %arg5[%c0_9, %c0_10] : memref<1x128xf32, #tpu.memory_space<vmem>>, vector<1x128xf32>
    %12 = vector.broadcast %11 : vector<1x128xf32> to vector<8x128xf32>
    %13 = arith.addf %10, %12 : vector<8x128xf32>
    %c0_11 = arith.constant 0 : index
    %c0_12 = arith.constant 0 : index
    %14 = vector.load %arg6[%c0_11, %c0_12] : memref<8x128xf32, #tpu.memory_space<vmem>>, vector<8x128xf32>
    tpu.vector_store %arg6[%c0_11, %c0_12], %13 {strides = array<i32>} : memref<8x128xf32, #tpu.memory_space<vmem>>, vector<8x128xf32>,
    return
  }
  func.func @transform_0(%arg0: i32) -> (i32, i32) {
    %c0_i32 = arith.constant 0 : i32
    %c0_i32_0 = arith.constant 0 : i32
    return %arg0, %c0_i32 : i32, i32
  }
  func.func @transform_1(%arg0: i32) -> (i32, i32) {
    %c0_i32 = arith.constant 0 : i32
    %c0_i32_0 = arith.constant 0 : i32
    %c0_i32_1 = arith.constant 0 : i32
    return %c0_i32, %c0_i32_0 : i32, i32
  }
  func.func @transform_2(%arg0: i32) -> (i32, i32) {
    %c0_i32 = arith.constant 0 : i32
    %c0_i32_0 = arith.constant 0 : i32
    %c0_i32_1 = arith.constant 0 : i32
    return %c0_i32, %c0_i32_0 : i32, i32
  }
  func.func @transform_3(%arg0: i32) -> (i32, i32) {
    %c0_i32 = arith.constant 0 : i32
    %c0_i32_0 = arith.constant 0 : i32
    %c0_i32_1 = arith.constant 0 : i32
    return %c0_i32, %c0_i32_0 : i32, i32
  }
  func.func @transform_4(%arg0: i32) -> (i32, i32) {
    %c0_i32 = arith.constant 0 : i32
    %c0_i32_0 = arith.constant 0 : i32
    %c0_i32_1 = arith.constant 0 : i32
    return %c0_i32, %c0_i32_0 : i32, i32
  }
  func.func @transform_5(%arg0: i32) -> (i32, i32) {
    %c0_i32 = arith.constant 0 : i32
    %c0_i32_0 = arith.constant 0 : i32
    return %arg0, %c0_i32 : i32, i32
  }
}

</mosaic_0001>

<llo_original>
// kernel: simple_cnn_forward.3
$region0: #{simple_cnn_forward.3}
  #allocation0 [shape = 'u32[]', space=smem, size = 0x4, offset = 0x4, fixed_abs, tag = 'smem constant byte address 0x4 - core index']
  #allocation1 [shape = 'u32[144,128]{1,0:T(1,128)}', space=vmem, size = 0x12000, scoped, tag = 'internal scratch']
  %s0 = inlined_call_operand.vmem [shape: bf16[4,384,25], index: 0, kind: input, shape index: {}]
  %s1 = inlined_call_operand.vmem [shape: bf16[25,128], index: 1, kind: input, shape index: {}]
  %s2 = inlined_call_operand.vmem [shape: f32[1,128], index: 2, kind: input, shape index: {}]
  %s3 = inlined_call_operand.vmem [shape: f32[384,128], index: 3, kind: output, shape index: {}]
  %s4 = sld [smem:[#allocation0]]
  $region86: #{simple_cnn_forward.3} parent=0
    _
  %s6 = ssub.s32 1, %s4
  %s7 = scalar_select 0, %s6, %s4
  $region1: #{simple_cnn_forward.3} parent=0
    #allocation2 [shape = 'u8[262144]{0}', space=vmem, size = 0x40000, scoped, tag = 'input window, operand 0']
    loop: start=0, step=1, limit=5
    $region2: #{simple_cnn_forward.3} parent=1 // loop_pre_header
      _
    $region3: #{simple_cnn_forward.3} parent=1 // loop_header
      %s9 = sphi 0, %s13
      %p10 = scmp.ge.s32.totalorder %s9, 5
      %s19 = sphi 0, %s21
      %s22 = sphi 0, %s19
      %s23 = sphi 0, %s22
      %s39 = sphi 0, %s23
      %s43 = sphi 0, %s43
      %s45 = sphi 0, %s43
      %s46 = sphi 0, %s45
      %s60 = sphi 0, %s46
      %s64 = sphi 0, %s64
      %s66 = sphi 0, %s64
      %s67 = sphi 0, %s66
      %s81 = sphi 0, %s67
      %s87 = sphi 0, %s89
      %s90 = sphi 0, %s87
      %s91 = sphi 0, %s90
      %s107 = sphi 0, %s91
    $region4: #{simple_cnn_forward.3} parent=1 // loop_header_branch
      %12 = sbr.rel (%p10) target = $region8
    $region5: #{simple_cnn_forward.3} parent=1 // loop_body
      %s14 = ssub.s32 %s9, 1
      %s15 = ssub.s32 %s9, 2
      %s16 = sadd.s32 %s9, 1
      %s17 = ssub.s32 %s9, %s16
      %p18 = scmp.eq.s32.totalorder %s17, 0
      %s20 = sadd.s32 %s19, 1
      %s21 = scalar_select %p18, %s19, %s20
      %p24 = pneg %p18
      %p25 = scmp.eq.s32.totalorder %s9, 2
      %p26 = por %p24, %p25
      %p27 = scmp.ne.s32.totalorder %s19, %s22
      %p28 = scmp.eq.s32.totalorder %s9, 0
      %p29 = por %p27, %p28
      %p30 = scmp.ne.s32.totalorder %s19, %s22
      %p31 = scmp.eq.s32.totalorder %s14, 2
      %p32 = por %p30, %p31
      %p33 = scmp.ne.s32.totalorder %s22, %s23
      %p34 = scmp.eq.s32.totalorder %s14, 0
      %p35 = por %p33, %p34
      %p36 = scmp.ne.s32.totalorder %s22, %s23
      %p37 = scmp.eq.s32.totalorder %s15, 2
      %p38 = por %p36, %p37
      %p40 = scmp.ne.s32.totalorder %s23, %s39
      %p41 = scmp.eq.s32.totalorder %s15, 0
      %p42 = por %p40, %p41
      %s44 = sadd.s32 %s43, 1
      %p47 = scmp.eq.s32.totalorder %s9, 2
      %p48 = scmp.ne.s32.totalorder %s43, %s45
      %p49 = scmp.eq.s32.totalorder %s9, 0
      %p50 = por %p48, %p49
      %p51 = scmp.ne.s32.totalorder %s43, %s45
      %p52 = scmp.eq.s32.totalorder %s14, 2
      %p53 = por %p51, %p52
      %p54 = scmp.ne.s32.totalorder %s45, %s46
      %p55 = scmp.eq.s32.totalorder %s14, 0
      %p56 = por %p54, %p55
      %p57 = scmp.ne.s32.totalorder %s45, %s46
      %p58 = scmp.eq.s32.totalorder %s15, 2
      %p59 = por %p57, %p58
      %p61 = scmp.ne.s32.totalorder %s46, %s60
      %p62 = scmp.eq.s32.totalorder %s15, 0
      %p63 = por %p61, %p62
      %s65 = sadd.s32 %s64, 1
      %p68 = scmp.eq.s32.totalorder %s9, 2
      %p69 = scmp.ne.s32.totalorder %s64, %s66
      %p70 = scmp.eq.s32.totalorder %s9, 0
      %p71 = por %p69, %p70
      %p72 = scmp.ne.s32.totalorder %s64, %s66
      %p73 = scmp.eq.s32.totalorder %s14, 2
      %p74 = por %p72, %p73
      %p75 = scmp.ne.s32.totalorder %s66, %s67
      %p76 = scmp.eq.s32.totalorder %s14, 0
      %p77 = por %p75, %p76
      %p78 = scmp.ne.s32.totalorder %s66, %s67
      %p79 = scmp.eq.s32.totalorder %s15, 2
      %p80 = por %p78, %p79
      %p82 = scmp.ne.s32.totalorder %s67, %s81
      %p83 = scmp.eq.s32.totalorder %s15, 0
      %p84 = por %p82, %p83
      %s85 = ssub.s32 %s9, %s16
      %p86 = scmp.eq.s32.totalorder %s85, 0
      %s88 = sadd.s32 %s87, 1
      %s89 = scalar_select %p86, %s87, %s88
      %p92 = pneg %p86
      %p93 = scmp.eq.s32.totalorder %s9, 2
      %p94 = por %p92, %p93
      %p95 = scmp.ne.s32.totalorder %s87, %s90
      %p96 = scmp.eq.s32.totalorder %s9, 0
      %p97 = por %p95, %p96
      %p98 = scmp.ne.s32.totalorder %s87, %s90
      %p99 = scmp.eq.s32.totalorder %s14, 2
      %p100 = por %p98, %p99
      %p101 = scmp.ne.s32.totalorder %s90, %s91
      %p102 = scmp.eq.s32.totalorder %s14, 0
      %p103 = por %p101, %p102
      %p104 = scmp.ne.s32.totalorder %s90, %s91
      %p105 = scmp.eq.s32.totalorder %s15, 2
      %p106 = por %p104, %p105
      %p108 = scmp.ne.s32.totalorder %s91, %s107
      %p109 = scmp.eq.s32.totalorder %s15, 0
      %p110 = por %p108, %p109
      %p111 = scmp.le.s32.totalorder 1, %s9
      %p112 = scmp.lt.s32.totalorder %s9, 4
      %p113 = pnand %p111, %p112
      %p114 = pneg %p113
      // Predicated region
      $region9: #{simple_cnn_forward.3} parent=5 // pred_check
        _
      $region10: #{simple_cnn_forward.3} parent=5 // pred_check_branch
        %116 = sbr.rel (%p113) target = $region12
      $region11: #{simple_cnn_forward.3} parent=5 // pred_region
        %s117 = ssub.s32 %s9, 1
        // Predicated region
        $region13: #{simple_cnn_forward.3} parent=11 // pred_check
          %p118 = pneg %p56
        $region14: #{simple_cnn_forward.3} parent=11 // pred_check_branch
          %120 = sbr.rel (%p118) target = $region16
        $region15: #{simple_cnn_forward.3} parent=11 // pred_region
          _
        $region16: #{simple_cnn_forward.3} parent=11 // pred_fallthru
          _
        // Predicated region
        $region17: #{simple_cnn_forward.3} parent=11 // pred_check
          %p121 = pneg %p77
        $region18: #{simple_cnn_forward.3} parent=11 // pred_check_branch
          %123 = sbr.rel (%p121) target = $region20
        $region19: #{simple_cnn_forward.3} parent=11 // pred_region
          _
        $region20: #{simple_cnn_forward.3} parent=11 // pred_fallthru
          _
      $region12: #{simple_cnn_forward.3} parent=5 // pred_fallthru
        _
      %p124 = scmp.lt.s32.totalorder %s9, 3
      // Predicated region
      $region21: #{simple_cnn_forward.3} parent=5 // pred_check
        %p125 = pneg %p124
      $region22: #{simple_cnn_forward.3} parent=5 // pred_check_branch
        %127 = sbr.rel (%p125) target = $region24
      $region23: #{simple_cnn_forward.3} parent=5 // pred_region
        // Predicated region
        $region25: #{simple_cnn_forward.3} parent=23 // pred_check
          %p128 = pneg %p29
        $region26: #{simple_cnn_forward.3} parent=23 // pred_check_branch
          %130 = sbr.rel (%p128) target = $region28
        $region27: #{simple_cnn_forward.3} parent=23 // pred_region
          %s131 = sand.u32 %s19, 1
          %s132 = sand.u32 %s19, 1
          %s133 = smul.addr %s132, 256
          %s134 = scalar_lea.vmem [#allocation2], %s133
          %s135 = smul.u32 16, %s9
          %s136 = smul.addr %s135, 4
          %s137 = scalar_lea.vmem %s0, %s136
          // Predicated region
          $region29: #{simple_cnn_forward.3} parent=27 // pred_check
            _
          $region30: #{simple_cnn_forward.3} parent=27 // pred_check_branch
            %139 = sbr.rel (0) target = $region32
          $region31: #{simple_cnn_forward.3} parent=27 // pred_region
            // Predicated region
            $region33: #{simple_cnn_forward.3} parent=31 // pred_check
              _
            $region34: #{simple_cnn_forward.3} parent=31 // pred_check_branch
              %141 = sbr.rel target = $region36
            $region35: #{simple_cnn_forward.3} parent=31 // pred_region
              // Predicated region
              $region48: #{simple_cnn_forward.3} parent=35 // pred_check
                _
              $region49: #{simple_cnn_forward.3} parent=35 // pred_check_branch
                %282 = sbr.rel (0) target = $region51
              $region50: #{simple_cnn_forward.3} parent=35 // pred_region
                loop: start=0, step=1, limit=1
                $region52: #{simple_cnn_forward.3} parent=50 // loop_pre_header
                  _
                $region53: #{simple_cnn_forward.3} parent=50 // loop_header
                  %s284 = sphi 0, %s288
                  %p285 = scmp.ge.s32.totalorder %s284, 1
                  %s289 = sphi %s137, %s137
                  %s290 = sphi %s134, %s134
                $region54: #{simple_cnn_forward.3} parent=50 // loop_header_branch
                  %287 = sbr.rel (%p285) target = $region58
                $region55: #{simple_cnn_forward.3} parent=50 // loop_body
                  _
                $region56: #{simple_cnn_forward.3} parent=50 // loop_footer
                  %s288 = sadd.s32 1, %s284
                $region57: #{simple_cnn_forward.3} parent=50 // loop_footer_branch
                  %283 = sbr.rel target = $region53
                $region58: #{simple_cnn_forward.3} parent=50 // loop_exit
                  _
                loop: start=0, step=1, limit=1
                $region59: #{simple_cnn_forward.3} parent=50 // loop_pre_header
                  _
                $region60: #{simple_cnn_forward.3} parent=50 // loop_header
                  %s293 = sphi 0, %s297
                  %p294 = scmp.ge.s32.totalorder %s293, 1
                  %s298 = sphi %s137, %s137
                  %s299 = sphi %s134, %s134
                $region61: #{simple_cnn_forward.3} parent=50 // loop_header_branch
                  %296 = sbr.rel (%p294) target = $region65
                $region62: #{simple_cnn_forward.3} parent=50 // loop_body
                  %v300 = vld [vmem:[%s298] sm:$0xf]
                  %301 = vst [vmem:[%s299] sm:$0xf] %v300
                  %v302 = vld [vmem:[%s298 + $0x4] sm:$0xf]
                  %303 = vst [vmem:[%s299 + $0x4] sm:$0xf] %v302
                  %v304 = vld [vmem:[%s298 + $0x8] sm:$0xf]
                  %305 = vst [vmem:[%s299 + $0x8] sm:$0xf] %v304
                  %v306 = vld [vmem:[%s298 + $0xc] sm:$0xf]
                  %307 = vst [vmem:[%s299 + $0xc] sm:$0xf] %v306
                  %v308 = vld [vmem:[%s298 + $0x10] sm:$0xf]
                  %309 = vst [vmem:[%s299 + $0x10] sm:$0xf] %v308
                  %v310 = vld [vmem:[%s298 + $0x14] sm:$0xf]
                  %311 = vst [vmem:[%s299 + $0x14] sm:$0xf] %v310
                  %v312 = vld [vmem:[%s298 + $0x18] sm:$0xf]
                  %313 = vst [vmem:[%s299 + $0x18] sm:$0xf] %v312
                  %v314 = vld [vmem:[%s298 + $0x1c] sm:$0xf]
                  %315 = vst [vmem:[%s299 + $0x1c] sm:$0xf] %v314
                  %v316 = vld [vmem:[%s298 + $0x20] sm:$0xf]
                  %317 = vst [vmem:[%s299 + $0x20] sm:$0xf] %v316
                  %v318 = vld [vmem:[%s298 + $0x24] sm:$0xf]
                  %319 = vst [vmem:[%s299 + $0x24] sm:$0xf] %v318
                  %v320 = vld [vmem:[%s298 + $0x28] sm:$0xf]
                  %321 = vst [vmem:[%s299 + $0x28] sm:$0xf] %v320
                  %v322 = vld [vmem:[%s298 + $0x2c] sm:$0xf]
                  %323 = vst [vmem:[%s299 + $0x2c] sm:$0xf] %v322
                  %v324 = vld [vmem:[%s298 + $0x30] sm:$0xf]
                  %325 = vst [vmem:[%s299 + $0x30] sm:$0xf] %v324
                  %v326 = vld [vmem:[%s298 + $0x34] sm:$0xf]
                  %327 = vst [vmem:[%s299 + $0x34] sm:$0xf] %v326
                  %v328 = vld [vmem:[%s298 + $0x38] sm:$0xf]
                  %329 = vst [vmem:[%s299 + $0x38] sm:$0xf] %v328
                  %v330 = vld [vmem:[%s298 + $0x3c] sm:$0xf]
                  %331 = vst [vmem:[%s299 + $0x3c] sm:$0xf] %v330
                  %v332 = vld [vmem:[%s298 + $0xc0] sm:$0xf]
                  %333 = vst [vmem:[%s299 + $0x40] sm:$0xf] %v332
                  %v334 = vld [vmem:[%s298 + $0xc4] sm:$0xf]
                  %335 = vst [vmem:[%s299 + $0x44] sm:$0xf] %v334
                  %v336 = vld [vmem:[%s298 + $0xc8] sm:$0xf]
                  %337 = vst [vmem:[%s299 + $0x48] sm:$0xf] %v336
                  %v338 = vld [vmem:[%s298 + $0xcc] sm:$0xf]
                  %339 = vst [vmem:[%s299 + $0x4c] sm:$0xf] %v338
                  %v340 = vld [vmem:[%s298 + $0xd0] sm:$0xf]
                  %341 = vst [vmem:[%s299 + $0x50] sm:$0xf] %v340
                  %v342 = vld [vmem:[%s298 + $0xd4] sm:$0xf]
                  %343 = vst [vmem:[%s299 + $0x54] sm:$0xf] %v342
                  %v344 = vld [vmem:[%s298 + $0xd8] sm:$0xf]
                  %345 = vst [vmem:[%s299 + $0x58] sm:$0xf] %v344
                  %v346 = vld [vmem:[%s298 + $0xdc] sm:$0xf]
                  %347 = vst [vmem:[%s299 + $0x5c] sm:$0xf] %v346
                  %v348 = vld [vmem:[%s298 + $0xe0] sm:$0xf]
                  %349 = vst [vmem:[%s299 + $0x60] sm:$0xf] %v348
                  %v350 = vld [vmem:[%s298 + $0xe4] sm:$0xf]
                  %351 = vst [vmem:[%s299 + $0x64] sm:$0xf] %v350
                  %v352 = vld [vmem:[%s298 + $0xe8] sm:$0xf]
                  %353 = vst [vmem:[%s299 + $0x68] sm:$0xf] %v352
                  %v354 = vld [vmem:[%s298 + $0xec] sm:$0xf]
                  %355 = vst [vmem:[%s299 + $0x6c] sm:$0xf] %v354
                  %v356 = vld [vmem:[%s298 + $0xf0] sm:$0xf]
                  %357 = vst [vmem:[%s299 + $0x70] sm:$0xf] %v356
                  %v358 = vld [vmem:[%s298 + $0xf4] sm:$0xf]
                  %359 = vst [vmem:[%s299 + $0x74] sm:$0xf] %v358
                  %v360 = vld [vmem:[%s298 + $0xf8] sm:$0xf]
                  %361 = vst [vmem:[%s299 + $0x78] sm:$0xf] %v360
                  %v362 = vld [vmem:[%s298 + $0xfc] sm:$0xf]
                  %363 = vst [vmem:[%s299 + $0x7c] sm:$0xf] %v362
                  %v364 = vld [vmem:[%s298 + $0x180] sm:$0xf]
                  %365 = vst [vmem:[%s299 + $0x80] sm:$0xf] %v364
                  %v366 = vld [vmem:[%s298 + $0x184] sm:$0xf]
                  %367 = vst [vmem:[%s299 + $0x84] sm:$0xf] %v366
                  %v368 = vld [vmem:[%s298 + $0x188] sm:$0xf]
                  %369 = vst [vmem:[%s299 + $0x88] sm:$0xf] %v368
                  %v370 = vld [vmem:[%s298 + $0x18c] sm:$0xf]
                  %371 = vst [vmem:[%s299 + $0x8c] sm:$0xf] %v370
                  %v372 = vld [vmem:[%s298 + $0x190] sm:$0xf]
                  %373 = vst [vmem:[%s299 + $0x90] sm:$0xf] %v372
                  %v374 = vld [vmem:[%s298 + $0x194] sm:$0xf]
                  %375 = vst [vmem:[%s299 + $0x94] sm:$0xf] %v374
                  %v376 = vld [vmem:[%s298 + $0x198] sm:$0xf]
                  %377 = vst [vmem:[%s299 + $0x98] sm:$0xf] %v376
                  %v378 = vld [vmem:[%s298 + $0x19c] sm:$0xf]
                  %379 = vst [vmem:[%s299 + $0x9c] sm:$0xf] %v378
                  %v380 = vld [vmem:[%s298 + $0x1a0] sm:$0xf]
                  %381 = vst [vmem:[%s299 + $0xa0] sm:$0xf] %v380
                  %v382 = vld [vmem:[%s298 + $0x1a4] sm:$0xf]
                  %383 = vst [vmem:[%s299 + $0xa4] sm:$0xf] %v382
                  %v384 = vld [vmem:[%s298 + $0x1a8] sm:$0xf]
                  %385 = vst [vmem:[%s299 + $0xa8] sm:$0xf] %v384
                  %v386 = vld [vmem:[%s298 + $0x1ac] sm:$0xf]
                  %387 = vst [vmem:[%s299 + $0xac] sm:$0xf] %v386
                  %v388 = vld [vmem:[%s298 + $0x1b0] sm:$0xf]
                  %389 = vst [vmem:[%s299 + $0xb0] sm:$0xf] %v388
                  %v390 = vld [vmem:[%s298 + $0x1b4] sm:$0xf]
                  %391 = vst [vmem:[%s299 + $0xb4] sm:$0xf] %v390
                  %v392 = vld [vmem:[%s298 + $0x1b8] sm:$0xf]
                  %393 = vst [vmem:[%s299 + $0xb8] sm:$0xf] %v392
                  %v394 = vld [vmem:[%s298 + $0x1bc] sm:$0xf]
                  %395 = vst [vmem:[%s299 + $0xbc] sm:$0xf] %v394
                  %v396 = vld [vmem:[%s298 + $0x240] sm:$0xf]
                  %397 = vst [vmem:[%s299 + $0xc0] sm:$0xf] %v396
                  %v398 = vld [vmem:[%s298 + $0x244] sm:$0xf]
                  %399 = vst [vmem:[%s299 + $0xc4] sm:$0xf] %v398
                  %v400 = vld [vmem:[%s298 + $0x248] sm:$0xf]
                  %401 = vst [vmem:[%s299 + $0xc8] sm:$0xf] %v400
                  %v402 = vld [vmem:[%s298 + $0x24c] sm:$0xf]
                  %403 = vst [vmem:[%s299 + $0xcc] sm:$0xf] %v402
                  %v404 = vld [vmem:[%s298 + $0x250] sm:$0xf]
                  %405 = vst [vmem:[%s299 + $0xd0] sm:$0xf] %v404
                  %v406 = vld [vmem:[%s298 + $0x254] sm:$0xf]
                  %407 = vst [vmem:[%s299 + $0xd4] sm:$0xf] %v406
                  %v408 = vld [vmem:[%s298 + $0x258] sm:$0xf]
                  %409 = vst [vmem:[%s299 + $0xd8] sm:$0xf] %v408
                  %v410 = vld [vmem:[%s298 + $0x25c] sm:$0xf]
                  %411 = vst [vmem:[%s299 + $0xdc] sm:$0xf] %v410
                  %v412 = vld [vmem:[%s298 + $0x260] sm:$0xf]
                  %413 = vst [vmem:[%s299 + $0xe0] sm:$0xf] %v412
                  %v414 = vld [vmem:[%s298 + $0x264] sm:$0xf]
                  %415 = vst [vmem:[%s299 + $0xe4] sm:$0xf] %v414
                  %v416 = vld [vmem:[%s298 + $0x268] sm:$0xf]
                  %417 = vst [vmem:[%s299 + $0xe8] sm:$0xf] %v416
                  %v418 = vld [vmem:[%s298 + $0x26c] sm:$0xf]
                  %419 = vst [vmem:[%s299 + $0xec] sm:$0xf] %v418
                  %v420 = vld [vmem:[%s298 + $0x270] sm:$0xf]
                  %421 = vst [vmem:[%s299 + $0xf0] sm:$0xf] %v420
                  %v422 = vld [vmem:[%s298 + $0x274] sm:$0xf]
                  %423 = vst [vmem:[%s299 + $0xf4] sm:$0xf] %v422
                  %v424 = vld [vmem:[%s298 + $0x278] sm:$0xf]
                  %425 = vst [vmem:[%s299 + $0xf8] sm:$0xf] %v424
                  %v426 = vld [vmem:[%s298 + $0x27c] sm:$0xf]
                  %427 = vst [vmem:[%s299 + $0xfc] sm:$0xf] %v426
                $region63: #{simple_cnn_forward.3} parent=50 // loop_footer
                  %s297 = sadd.s32 1, %s293
                $region64: #{simple_cnn_forward.3} parent=50 // loop_footer_branch
                  %292 = sbr.rel target = $region60
                $region65: #{simple_cnn_forward.3} parent=50 // loop_exit
                  _
              $region51: #{simple_cnn_forward.3} parent=35 // pred_fallthru
                _
            $region36: #{simple_cnn_forward.3} parent=31 // pred_fallthru
              _
            // Predicated region
            $region37: #{simple_cnn_forward.3} parent=31 // pred_check
              _
            $region38: #{simple_cnn_forward.3} parent=31 // pred_check_branch
              %143 = sbr.rel (0) target = $region40
            $region39: #{simple_cnn_forward.3} parent=31 // pred_region
              loop: start=0, step=1, limit=1
              $region41: #{simple_cnn_forward.3} parent=39 // loop_pre_header
                _
              $region42: #{simple_cnn_forward.3} parent=39 // loop_header
                %s146 = sphi 0, %s150
                %p147 = scmp.ge.s32.totalorder %s146, 1
                %s151 = sphi %s137, %s137
                %s152 = sphi %s134, %s134
              $region43: #{simple_cnn_forward.3} parent=39 // loop_header_branch
                %149 = sbr.rel (%p147) target = $region47
              $region44: #{simple_cnn_forward.3} parent=39 // loop_body
                %v153 = vld [vmem:[%s151] sm:$0xf]
                %154 = vst [vmem:[%s152] sm:$0xf] %v153
                %v155 = vld [vmem:[%s151 + $0x4] sm:$0xf]
                %156 = vst [vmem:[%s152 + $0x4] sm:$0xf] %v155
                %v157 = vld [vmem:[%s151 + $0x8] sm:$0xf]
                %158 = vst [vmem:[%s152 + $0x8] sm:$0xf] %v157
                %v159 = vld [vmem:[%s151 + $0xc] sm:$0xf]
                %160 = vst [vmem:[%s152 + $0xc] sm:$0xf] %v159
                %v161 = vld [vmem:[%s151 + $0x10] sm:$0xf]
                %162 = vst [vmem:[%s152 + $0x10] sm:$0xf] %v161
                %v163 = vld [vmem:[%s151 + $0x14] sm:$0xf]
                %164 = vst [vmem:[%s152 + $0x14] sm:$0xf] %v163
                %v165 = vld [vmem:[%s151 + $0x18] sm:$0xf]
                %166 = vst [vmem:[%s152 + $0x18] sm:$0xf] %v165
                %v167 = vld [vmem:[%s151 + $0x1c] sm:$0xf]
                %168 = vst [vmem:[%s152 + $0x1c] sm:$0xf] %v167
                %v169 = vld [vmem:[%s151 + $0x20] sm:$0xf]
                %170 = vst [vmem:[%s152 + $0x20] sm:$0xf] %v169
                %v171 = vld [vmem:[%s151 + $0x24] sm:$0xf]
                %172 = vst [vmem:[%s152 + $0x24] sm:$0xf] %v171
                %v173 = vld [vmem:[%s151 + $0x28] sm:$0xf]
                %174 = vst [vmem:[%s152 + $0x28] sm:$0xf] %v173
                %v175 = vld [vmem:[%s151 + $0x2c] sm:$0xf]
                %176 = vst [vmem:[%s152 + $0x2c] sm:$0xf] %v175
                %v177 = vld [vmem:[%s151 + $0x30] sm:$0xf]
                %178 = vst [vmem:[%s152 + $0x30] sm:$0xf] %v177
                %v179 = vld [vmem:[%s151 + $0x34] sm:$0xf]
                %180 = vst [vmem:[%s152 + $0x34] sm:$0xf] %v179
                %v181 = vld [vmem:[%s151 + $0x38] sm:$0xf]
                %182 = vst [vmem:[%s152 + $0x38] sm:$0xf] %v181
                %v183 = vld [vmem:[%s151 + $0x3c] sm:$0xf]
                %184 = vst [vmem:[%s152 + $0x3c] sm:$0xf] %v183
                %v185 = vld [vmem:[%s151 + $0xc0] sm:$0xf]
                %186 = vst [vmem:[%s152 + $0x40] sm:$0xf] %v185
                %v187 = vld [vmem:[%s151 + $0xc4] sm:$0xf]
                %188 = vst [vmem:[%s152 + $0x44] sm:$0xf] %v187
                %v189 = vld [vmem:[%s151 + $0xc8] sm:$0xf]
                %190 = vst [vmem:[%s152 + $0x48] sm:$0xf] %v189
                %v191 = vld [vmem:[%s151 + $0xcc] sm:$0xf]
                %192 = vst [vmem:[%s152 + $0x4c] sm:$0xf] %v191
                %v193 = vld [vmem:[%s151 + $0xd0] sm:$0xf]
                %194 = vst [vmem:[%s152 + $0x50] sm:$0xf] %v193
                %v195 = vld [vmem:[%s151 + $0xd4] sm:$0xf]
                %196 = vst [vmem:[%s152 + $0x54] sm:$0xf] %v195
                %v197 = vld [vmem:[%s151 + $0xd8] sm:$0xf]
                %198 = vst [vmem:[%s152 + $0x58] sm:$0xf] %v197
                %v199 = vld [vmem:[%s151 + $0xdc] sm:$0xf]
                %200 = vst [vmem:[%s152 + $0x5c] sm:$0xf] %v199
                %v201 = vld [vmem:[%s151 + $0xe0] sm:$0xf]
                %202 = vst [vmem:[%s152 + $0x60] sm:$0xf] %v201
                %v203 = vld [vmem:[%s151 + $0xe4] sm:$0xf]
                %204 = vst [vmem:[%s152 + $0x64] sm:$0xf] %v203
                %v205 = vld [vmem:[%s151 + $0xe8] sm:$0xf]
                %206 = vst [vmem:[%s152 + $0x68] sm:$0xf] %v205
                %v207 = vld [vmem:[%s151 + $0xec] sm:$0xf]
                %208 = vst [vmem:[%s152 + $0x6c] sm:$0xf] %v207
                %v209 = vld [vmem:[%s151 + $0xf0] sm:$0xf]
                %210 = vst [vmem:[%s152 + $0x70] sm:$0xf] %v209
                %v211 = vld [vmem:[%s151 + $0xf4] sm:$0xf]
                %212 = vst [vmem:[%s152 + $0x74] sm:$0xf] %v211
                %v213 = vld [vmem:[%s151 + $0xf8] sm:$0xf]
                %214 = vst [vmem:[%s152 + $0x78] sm:$0xf] %v213
                %v215 = vld [vmem:[%s151 + $0xfc] sm:$0xf]
                %216 = vst [vmem:[%s152 + $0x7c] sm:$0xf] %v215
                %v217 = vld [vmem:[%s151 + $0x180] sm:$0xf]
                %218 = vst [vmem:[%s152 + $0x80] sm:$0xf] %v217
                %v219 = vld [vmem:[%s151 + $0x184] sm:$0xf]
                %220 = vst [vmem:[%s152 + $0x84] sm:$0xf] %v219
                %v221 = vld [vmem:[%s151 + $0x188] sm:$0xf]
                %222 = vst [vmem:[%s152 + $0x88] sm:$0xf] %v221
                %v223 = vld [vmem:[%s151 + $0x18c] sm:$0xf]
                %224 = vst [vmem:[%s152 + $0x8c] sm:$0xf] %v223
                %v225 = vld [vmem:[%s151 + $0x190] sm:$0xf]
                %226 = vst [vmem:[%s152 + $0x90] sm:$0xf] %v225
                %v227 = vld [vmem:[%s151 + $0x194] sm:$0xf]
                %228 = vst [vmem:[%s152 + $0x94] sm:$0xf] %v227
                %v229 = vld [vmem:[%s151 + $0x198] sm:$0xf]
                %230 = vst [vmem:[%s152 + $0x98] sm:$0xf] %v229
                %v231 = vld [vmem:[%s151 + $0x19c] sm:$0xf]
                %232 = vst [vmem:[%s152 + $0x9c] sm:$0xf] %v231
                %v233 = vld [vmem:[%s151 + $0x1a0] sm:$0xf]
                %234 = vst [vmem:[%s152 + $0xa0] sm:$0xf] %v233
                %v235 = vld [vmem:[%s151 + $0x1a4] sm:$0xf]
                %236 = vst [vmem:[%s152 + $0xa4] sm:$0xf] %v235
                %v237 = vld [vmem:[%s151 + $0x1a8] sm:$0xf]
                %238 = vst [vmem:[%s152 + $0xa8] sm:$0xf] %v237
                %v239 = vld [vmem:[%s151 + $0x1ac] sm:$0xf]
                %240 = vst [vmem:[%s152 + $0xac] sm:$0xf] %v239
                %v241 = vld [vmem:[%s151 + $0x1b0] sm:$0xf]
                %242 = vst [vmem:[%s152 + $0xb0] sm:$0xf] %v241
                %v243 = vld [vmem:[%s151 + $0x1b4] sm:$0xf]
                %244 = vst [vmem:[%s152 + $0xb4] sm:$0xf] %v243
                %v245 = vld [vmem:[%s151 + $0x1b8] sm:$0xf]
                %246 = vst [vmem:[%s152 + $0xb8] sm:$0xf] %v245
                %v247 = vld [vmem:[%s151 + $0x1bc] sm:$0xf]
                %248 = vst [vmem:[%s152 + $0xbc] sm:$0xf] %v247
                %v249 = vld [vmem:[%s151 + $0x240] sm:$0xf]
                %250 = vst [vmem:[%s152 + $0xc0] sm:$0xf] %v249
                %v251 = vld [vmem:[%s151 + $0x244] sm:$0xf]
                %252 = vst [vmem:[%s152 + $0xc4] sm:$0xf] %v251
                %v253 = vld [vmem:[%s151 + $0x248] sm:$0xf]
                %254 = vst [vmem:[%s152 + $0xc8] sm:$0xf] %v253
                %v255 = vld [vmem:[%s151 + $0x24c] sm:$0xf]
                %256 = vst [vmem:[%s152 + $0xcc] sm:$0xf] %v255
                %v257 = vld [vmem:[%s151 + $0x250] sm:$0xf]
                %258 = vst [vmem:[%s152 + $0xd0] sm:$0xf] %v257
                %v259 = vld [vmem:[%s151 + $0x254] sm:$0xf]
                %260 = vst [vmem:[%s152 + $0xd4] sm:$0xf] %v259
                %v261 = vld [vmem:[%s151 + $0x258] sm:$0xf]
                %262 = vst [vmem:[%s152 + $0xd8] sm:$0xf] %v261
                %v263 = vld [vmem:[%s151 + $0x25c] sm:$0xf]
                %264 = vst [vmem:[%s152 + $0xdc] sm:$0xf] %v263
                %v265 = vld [vmem:[%s151 + $0x260] sm:$0xf]
                %266 = vst [vmem:[%s152 + $0xe0] sm:$0xf] %v265
                %v267 = vld [vmem:[%s151 + $0x264] sm:$0xf]
                %268 = vst [vmem:[%s152 + $0xe4] sm:$0xf] %v267
                %v269 = vld [vmem:[%s151 + $0x268] sm:$0xf]
                %270 = vst [vmem:[%s152 + $0xe8] sm:$0xf] %v269
                %v271 = vld [vmem:[%s151 + $0x26c] sm:$0xf]
                %272 = vst [vmem:[%s152 + $0xec] sm:$0xf] %v271
                %v273 = vld [vmem:[%s151 + $0x270] sm:$0xf]
                %274 = vst [vmem:[%s152 + $0xf0] sm:$0xf] %v273
                %v275 = vld [vmem:[%s151 + $0x274] sm:$0xf]
                %276 = vst [vmem:[%s152 + $0xf4] sm:$0xf] %v275
                %v277 = vld [vmem:[%s151 + $0x278] sm:$0xf]
                %278 = vst [vmem:[%s152 + $0xf8] sm:$0xf] %v277
                %v279 = vld [vmem:[%s151 + $0x27c] sm:$0xf]
                %280 = vst [vmem:[%s152 + $0xfc] sm:$0xf] %v279
              $region45: #{simple_cnn_forward.3} parent=39 // loop_footer
                %s150 = sadd.s32 1, %s146
              $region46: #{simple_cnn_forward.3} parent=39 // loop_footer_branch
                %145 = sbr.rel target = $region42
              $region47: #{simple_cnn_forward.3} parent=39 // loop_exit
                _
            $region40: #{simple_cnn_forward.3} parent=31 // pred_fallthru
              _
          $region32: #{simple_cnn_forward.3} parent=27 // pred_fallthru
            _
          %428 = vnop
        $region28: #{simple_cnn_forward.3} parent=23 // pred_fallthru
          _
      $region24: #{simple_cnn_forward.3} parent=5 // pred_fallthru
        _
      %p429 = scmp.le.s32.totalorder 1, %s9
      %p430 = scmp.lt.s32.totalorder %s9, 4
      %p431 = pnand %p429, %p430
      %p432 = pneg %p431
      // Predicated region
      $region66: #{simple_cnn_forward.3} parent=5 // pred_check
        _
      $region67: #{simple_cnn_forward.3} parent=5 // pred_check_branch
        %434 = sbr.rel (%p431) target = $region69
      $region68: #{simple_cnn_forward.3} parent=5 // pred_region
        %s435 = ssub.s32 %s9, 1
        %s436 = sand.u32 %s22, 1
        %s437 = sand.u32 %s22, 1
        %s438 = smul.addr %s437, 256
        %s439 = scalar_lea.vmem [#allocation2], %s438
        // Predicated region
        $region70: #{simple_cnn_forward.3} parent=68 // pred_check
          %p440 = pneg %p35
        $region71: #{simple_cnn_forward.3} parent=68 // pred_check_branch
          %442 = sbr.rel (%p440) target = $region73
        $region72: #{simple_cnn_forward.3} parent=68 // pred_region
          _
        $region73: #{simple_cnn_forward.3} parent=68 // pred_fallthru
          _
        %s443 = sand.u32 %s22, 1
        %s444 = sand.u32 %s22, 1
        %s445 = smul.addr %s444, 256
        %s446 = scalar_lea.vmem [#allocation2], %s445
        %p447 = pneg %p35
        %p448 = pneg %p32
        %p449 = pneg %p56
        %p450 = pneg %p53
        %p451 = pneg %p77
        %p452 = pneg %p74
        %p453 = pneg %p103
        %p454 = pneg %p100
        %s455 = smul.u32 16, %s14
        %p456 = scmp.lt.s32.totalorder %s455, 47
        %s457 = scalar_select %p456, %s455, 47
        %s458 = smul.addr %s457, 8
        %s459 = scalar_lea.vmem %s3, %s458
        %s460 = smul.u32 16, %s14
        %s461 = smul.u32 16, %s14
        %p462 = scmp.lt.s32.totalorder %s461, 47
        %s463 = scalar_select %p462, %s461, 47
        %s464 = smul.addr %s463, 8
        %s465 = scalar_lea.vmem %s3, %s464
        %s466 = smul.u32 16, %s14
        %v468 = vld [vmem:[%s1] sm:$0xf]
        %v469 = vld [vmem:[%s1 + $0x4] sm:$0xf]
        %v470 = vld [vmem:[%s1 + $0x8] sm:$0xf]
        %v471 = vld [vmem:[%s1 + $0xc] sm:$0x1]
        %v472 = vld [vmem:[%s439] sm:$0xf]
        %v473 = vld [vmem:[%s439 + $0x4] sm:$0xf]
        %v474 = vld [vmem:[%s439 + $0x8] sm:$0xf]
        %v475 = vld [vmem:[%s439 + $0xc] sm:$0xf]
        %v476 = vld [vmem:[%s439 + $0x10] sm:$0xf]
        %v477 = vld [vmem:[%s439 + $0x14] sm:$0xf]
        %v478 = vld [vmem:[%s439 + $0x18] sm:$0xf]
        %v479 = vld [vmem:[%s439 + $0x1c] sm:$0xf]
        %v480 = vld [vmem:[%s439 + $0x20] sm:$0xf]
        %v481 = vld [vmem:[%s439 + $0x24] sm:$0xf]
        %v482 = vld [vmem:[%s439 + $0x28] sm:$0xf]
        %v483 = vld [vmem:[%s439 + $0x2c] sm:$0xf]
        %v484 = vld [vmem:[%s439 + $0x30] sm:$0xf]
        %v485 = vld [vmem:[%s439 + $0x34] sm:$0xf]
        %v486 = vld [vmem:[%s439 + $0x38] sm:$0xf]
        %v487 = vld [vmem:[%s439 + $0x3c] sm:$0xf]
        %v504 = vunpack.c.l.b16 %v472
        %v505 = vunpack.c.l.b16 %v473
        %v506 = vunpack.c.l.b16 %v474
        %v507 = vunpack.c.l.b16 %v475
        %v508 = vunpack.c.l.b16 %v476
        %v509 = vunpack.c.l.b16 %v477
        %v510 = vunpack.c.l.b16 %v478
        %v511 = vunpack.c.l.b16 %v479
        %v512 = vunpack.c.l.b16 %v480
        %v513 = vunpack.c.l.b16 %v481
        %v514 = vunpack.c.l.b16 %v482
        %v515 = vunpack.c.l.b16 %v483
        %v516 = vunpack.c.l.b16 %v484
        %v517 = vunpack.c.l.b16 %v485
        %v518 = vunpack.c.l.b16 %v486
        %v519 = vunpack.c.l.b16 %v487
        %v520 = vpack.c.b16 %v505, %v504
        %v521 = vpack.c.b16 %v507, %v506
        %v522 = vpack.c.b16 %v509, %v508
        %v523 = vpack.c.b16 %v511, %v510
        %v524 = vpack.c.b16 %v513, %v512
        %v525 = vpack.c.b16 %v515, %v514
        %v526 = vpack.c.b16 %v517, %v516
        %v527 = vpack.c.b16 %v519, %v518
        %v532 = vunpack.c.l.b16 %v468
        %v533 = vunpack.c.l.b16 %v469
        %v534 = vunpack.c.l.b16 %v470
        %v535 = vunpack.c.l.b16 %v471
        %v536 = vpack.c.b16 %v533, %v532
        %v537 = vpack.c.b16 %v535, %v534
        %vm539 = vcmask 203776
        %v541 = vsel %vm539, %v520, 0
        %v544 = vsel %vm539, %v521, 0
        %v547 = vsel %vm539, %v522, 0
        %v550 = vsel %vm539, %v523, 0
        %v553 = vsel %vm539, %v524, 0
        %v556 = vsel %vm539, %v525, 0
        %v559 = vsel %vm539, %v526, 0
        %v562 = vsel %vm539, %v527, 0
        %vm564 = vcmask 1043456
        %vm565 = vcmask 1044480
        %v566 = vsel %vm564, 4294967295, 65535
        %v567 = vsel %vm565, %v566, 0
        %v569 = vand.u32 %v537, %v567
        %571 = vmatprep.subr.bf16.mxu0 0
        %572 = vmatpush1.bf16.msra.mxu0 %v536
        %573 = vmatprep.subr.bf16.mxu0 0
        %574 = vmatpush1.bf16.msra.mxu0 %v569
        %575 = vmatprep.subr.bf16.mxu0 0
        %576 = vmatpush1.bf16.msra.mxu0 0
        %577 = vmatprep.subr.bf16.mxu0 0
        %578 = vmatpush1.bf16.msra.mxu0 0
        %579 = vmatprep.subr.bf16.mxu0 0
        %580 = vmatpush1.bf16.msra.mxu0 0
        %581 = vmatprep.subr.bf16.mxu0 0
        %582 = vmatpush1.bf16.msra.mxu0 0
        %583 = vmatprep.subr.bf16.mxu0 0
        %584 = vmatpush1.bf16.msra.mxu0 0
        %585 = vmatprep.subr.bf16.mxu0 0
        %586 = vmatpush1.bf16.msra.mxu0 0
        %587 = vmatprep.subr.bf16.mxu0 0
        %588 = vmatpush1.bf16.msra.mxu0 0
        %589 = vmatprep.subr.bf16.mxu0 0
        %590 = vmatpush1.bf16.msra.mxu0 0
        %591 = vmatprep.subr.bf16.mxu0 0
        %592 = vmatpush1.bf16.msra.mxu0 0
        %593 = vmatprep.subr.bf16.mxu0 0
        %594 = vmatpush1.bf16.msra.mxu0 0
        %595 = vmatprep.subr.bf16.mxu0 0
        %596 = vmatpush1.bf16.msra.mxu0 0
        %597 = vmatprep.subr.bf16.mxu0 0
        %598 = vmatpush1.bf16.msra.mxu0 0
        %599 = vmatprep.subr.bf16.mxu0 0
        %600 = vmatpush1.bf16.msra.mxu0 0
        %601 = vmatprep.subr.bf16.mxu0 0
        %602 = vmatpush1.bf16.msra.mxu0 0
        %603 = vmatprep.mubr.bf16.mxu0 0
        %604 = vmatmul.mubr.bf16.gmra.mrb[0].mxu0 %v541
        %v605 = vpop.f32.mrb[0].mxu0
        %v606 = vadd.f32 0.0, %v605
        %v607 = vpop.f32.mrb[0].mxu0
        %v608 = vpop.f32.mrb[0].mxu0
        %v609 = vadd.f32 0.0, %v608
        %v610 = vpop.f32.mrb[0].mxu0
        %611 = vmatprep.mubr.bf16.mxu0 0
        %612 = vmatmul.mubr.bf16.gmra.mrb[0].mxu0 %v544
        %v613 = vpop.f32.mrb[0].mxu0
        %v614 = vadd.f32 0.0, %v613
        %v615 = vpop.f32.mrb[0].mxu0
        %v616 = vpop.f32.mrb[0].mxu0
        %v617 = vadd.f32 0.0, %v616
        %v618 = vpop.f32.mrb[0].mxu0
        %619 = vmatprep.mubr.bf16.mxu0 0
        %620 = vmatmul.mubr.bf16.gmra.mrb[0].mxu0 %v547
        %v621 = vpop.f32.mrb[0].mxu0
        %v622 = vadd.f32 0.0, %v621
        %v623 = vpop.f32.mrb[0].mxu0
        %v624 = vpop.f32.mrb[0].mxu0
        %v625 = vadd.f32 0.0, %v624
        %v626 = vpop.f32.mrb[0].mxu0
        %627 = vmatprep.mubr.bf16.mxu0 0
        %628 = vmatmul.mubr.bf16.gmra.mrb[0].mxu0 %v550
        %v629 = vpop.f32.mrb[0].mxu0
        %v630 = vadd.f32 0.0, %v629
        %v631 = vpop.f32.mrb[0].mxu0
        %v632 = vpop.f32.mrb[0].mxu0
        %v633 = vadd.f32 0.0, %v632
        %v634 = vpop.f32.mrb[0].mxu0
        %635 = vmatprep.mubr.bf16.mxu0 0
        %636 = vmatmul.mubr.bf16.gmra.mrb[0].mxu0 %v553
        %v637 = vpop.f32.mrb[0].mxu0
        %v638 = vadd.f32 0.0, %v637
        %v639 = vpop.f32.mrb[0].mxu0
        %v640 = vpop.f32.mrb[0].mxu0
        %v641 = vadd.f32 0.0, %v640
        %v642 = vpop.f32.mrb[0].mxu0
        %643 = vmatprep.mubr.bf16.mxu0 0
        %644 = vmatmul.mubr.bf16.gmra.mrb[0].mxu0 %v556
        %v645 = vpop.f32.mrb[0].mxu0
        %v646 = vadd.f32 0.0, %v645
        %v647 = vpop.f32.mrb[0].mxu0
        %v648 = vpop.f32.mrb[0].mxu0
        %v649 = vadd.f32 0.0, %v648
        %v650 = vpop.f32.mrb[0].mxu0
        %651 = vmatprep.mubr.bf16.mxu0 0
        %652 = vmatmul.mubr.bf16.gmra.mrb[0].mxu0 %v559
        %v653 = vpop.f32.mrb[0].mxu0
        %v654 = vadd.f32 0.0, %v653
        %v655 = vpop.f32.mrb[0].mxu0
        %v656 = vpop.f32.mrb[0].mxu0
        %v657 = vadd.f32 0.0, %v656
        %v658 = vpop.f32.mrb[0].mxu0
        %659 = vmatprep.mubr.bf16.mxu0 0
        %660 = vmatmul.mubr.bf16.gmra.mrb[0].mxu0 %v562
        %v661 = vpop.f32.mrb[0].mxu0
        %v662 = vadd.f32 0.0, %v661
        %v663 = vpop.f32.mrb[0].mxu0
        %v664 = vpop.f32.mrb[0].mxu0
        %v665 = vadd.f32 0.0, %v664
        %v666 = vpop.f32.mrb[0].mxu0
        %667 = vdwg.mxu0
        %s668 = scalar_lea.vmem %s439, 64 [#allocation2]
        %v669 = vld [vmem:[%s668] sm:$0xf]
        %v670 = vld [vmem:[%s668 + $0x4] sm:$0xf]
        %v671 = vld [vmem:[%s668 + $0x8] sm:$0xf]
        %v672 = vld [vmem:[%s668 + $0xc] sm:$0xf]
        %v673 = vld [vmem:[%s668 + $0x10] sm:$0xf]
        %v674 = vld [vmem:[%s668 + $0x14] sm:$0xf]
        %v675 = vld [vmem:[%s668 + $0x18] sm:$0xf]
        %v676 = vld [vmem:[%s668 + $0x1c] sm:$0xf]
        %v677 = vld [vmem:[%s668 + $0x20] sm:$0xf]
        %v678 = vld [vmem:[%s668 + $0x24] sm:$0xf]
        %v679 = vld [vmem:[%s668 + $0x28] sm:$0xf]
        %v680 = vld [vmem:[%s668 + $0x2c] sm:$0xf]
        %v681 = vld [vmem:[%s668 + $0x30] sm:$0xf]
        %v682 = vld [vmem:[%s668 + $0x34] sm:$0xf]
        %v683 = vld [vmem:[%s668 + $0x38] sm:$0xf]
        %v684 = vld [vmem:[%s668 + $0x3c] sm:$0xf]
        %v701 = vunpack.c.l.b16 %v669
        %v702 = vunpack.c.l.b16 %v670
        %v703 = vunpack.c.l.b16 %v671
        %v704 = vunpack.c.l.b16 %v672
        %v705 = vunpack.c.l.b16 %v673
        %v706 = vunpack.c.l.b16 %v674
        %v707 = vunpack.c.l.b16 %v675
        %v708 = vunpack.c.l.b16 %v676
        %v709 = vunpack.c.l.b16 %v677
        %v710 = vunpack.c.l.b16 %v678
        %v711 = vunpack.c.l.b16 %v679
        %v712 = vunpack.c.l.b16 %v680
        %v713 = vunpack.c.l.b16 %v681
        %v714 = vunpack.c.l.b16 %v682
        %v715 = vunpack.c.l.b16 %v683
        %v716 = vunpack.c.l.b16 %v684
        %v717 = vpack.c.b16 %v702, %v701
        %v718 = vpack.c.b16 %v704, %v703
        %v719 = vpack.c.b16 %v706, %v705
        %v720 = vpack.c.b16 %v708, %v707
        %v721 = vpack.c.b16 %v710, %v709
        %v722 = vpack.c.b16 %v712, %v711
        %v723 = vpack.c.b16 %v714, %v713
        %v724 = vpack.c.b16 %v716, %v715
        %v726 = vsel %vm539, %v717, 0
        %v729 = vsel %vm539, %v718, 0
        %v732 = vsel %vm539, %v719, 0
        %v735 = vsel %vm539, %v720, 0
        %v738 = vsel %vm539, %v721, 0
        %v741 = vsel %vm539, %v722, 0
        %v744 = vsel %vm539, %v723, 0
        %v747 = vsel %vm539, %v724, 0
        %749 = vmatprep.subr.bf16.mxu0 0
        %750 = vmatpush1.bf16.msra.mxu0 %v536
        %751 = vmatprep.subr.bf16.mxu0 0
        %752 = vmatpush1.bf16.msra.mxu0 %v569
        %753 = vmatprep.subr.bf16.mxu0 0
        %754 = vmatpush1.bf16.msra.mxu0 0
        %755 = vmatprep.subr.bf16.mxu0 0
        %756 = vmatpush1.bf16.msra.mxu0 0
        %757 = vmatprep.subr.bf16.mxu0 0
        %758 = vmatpush1.bf16.msra.mxu0 0
        %759 = vmatprep.subr.bf16.mxu0 0
        %760 = vmatpush1.bf16.msra.mxu0 0
        %761 = vmatprep.subr.bf16.mxu0 0
        %762 = vmatpush1.bf16.msra.mxu0 0
        %763 = vmatprep.subr.bf16.mxu0 0
        %764 = vmatpush1.bf16.msra.mxu0 0
        %765 = vmatprep.subr.bf16.mxu0 0
        %766 = vmatpush1.bf16.msra.mxu0 0
        %767 = vmatprep.subr.bf16.mxu0 0
        %768 = vmatpush1.bf16.msra.mxu0 0
        %769 = vmatprep.subr.bf16.mxu0 0
        %770 = vmatpush1.bf16.msra.mxu0 0
        %771 = vmatprep.subr.bf16.mxu0 0
        %772 = vmatpush1.bf16.msra.mxu0 0
        %773 = vmatprep.subr.bf16.mxu0 0
        %774 = vmatpush1.bf16.msra.mxu0 0
        %775 = vmatprep.subr.bf16.mxu0 0
        %776 = vmatpush1.bf16.msra.mxu0 0
        %777 = vmatprep.subr.bf16.mxu0 0
        %778 = vmatpush1.bf16.msra.mxu0 0
        %779 = vmatprep.subr.bf16.mxu0 0
        %780 = vmatpush1.bf16.msra.mxu0 0
        %781 = vmatprep.mubr.bf16.mxu0 0
        %782 = vmatmul.mubr.bf16.gmra.mrb[0].mxu0 %v726
        %v783 = vpop.f32.mrb[0].mxu0
        %v784 = vadd.f32 0.0, %v783
        %v785 = vpop.f32.mrb[0].mxu0
        %v786 = vpop.f32.mrb[0].mxu0
        %v787 = vadd.f32 0.0, %v786
        %v788 = vpop.f32.mrb[0].mxu0
        %789 = vmatprep.mubr.bf16.mxu0 0
        %790 = vmatmul.mubr.bf16.gmra.mrb[0].mxu0 %v729
        %v791 = vpop.f32.mrb[0].mxu0
        %v792 = vadd.f32 0.0, %v791
        %v793 = vpop.f32.mrb[0].mxu0
        %v794 = vpop.f32.mrb[0].mxu0
        %v795 = vadd.f32 0.0, %v794
        %v796 = vpop.f32.mrb[0].mxu0
        %797 = vmatprep.mubr.bf16.mxu0 0
        %798 = vmatmul.mubr.bf16.gmra.mrb[0].mxu0 %v732
        %v799 = vpop.f32.mrb[0].mxu0
        %v800 = vadd.f32 0.0, %v799
        %v801 = vpop.f32.mrb[0].mxu0
        %v802 = vpop.f32.mrb[0].mxu0
        %v803 = vadd.f32 0.0, %v802
        %v804 = vpop.f32.mrb[0].mxu0
        %805 = vmatprep.mubr.bf16.mxu0 0
        %806 = vmatmul.mubr.bf16.gmra.mrb[0].mxu0 %v735
        %v807 = vpop.f32.mrb[0].mxu0
        %v808 = vadd.f32 0.0, %v807
        %v809 = vpop.f32.mrb[0].mxu0
        %v810 = vpop.f32.mrb[0].mxu0
        %v811 = vadd.f32 0.0, %v810
        %v812 = vpop.f32.mrb[0].mxu0
        %813 = vmatprep.mubr.bf16.mxu0 0
        %814 = vmatmul.mubr.bf16.gmra.mrb[0].mxu0 %v738
        %v815 = vpop.f32.mrb[0].mxu0
        %v816 = vadd.f32 0.0, %v815
        %v817 = vpop.f32.mrb[0].mxu0
        %v818 = vpop.f32.mrb[0].mxu0
        %v819 = vadd.f32 0.0, %v818
        %v820 = vpop.f32.mrb[0].mxu0
        %821 = vmatprep.mubr.bf16.mxu0 0
        %822 = vmatmul.mubr.bf16.gmra.mrb[0].mxu0 %v741
        %v823 = vpop.f32.mrb[0].mxu0
        %v824 = vadd.f32 0.0, %v823
        %v825 = vpop.f32.mrb[0].mxu0
        %v826 = vpop.f32.mrb[0].mxu0
        %v827 = vadd.f32 0.0, %v826
        %v828 = vpop.f32.mrb[0].mxu0
        %829 = vmatprep.mubr.bf16.mxu0 0
        %830 = vmatmul.mubr.bf16.gmra.mrb[0].mxu0 %v744
        %v831 = vpop.f32.mrb[0].mxu0
        %v832 = vadd.f32 0.0, %v831
        %v833 = vpop.f32.mrb[0].mxu0
        %v834 = vpop.f32.mrb[0].mxu0
        %v835 = vadd.f32 0.0, %v834
        %v836 = vpop.f32.mrb[0].mxu0
        %837 = vmatprep.mubr.bf16.mxu0 0
        %838 = vmatmul.mubr.bf16.gmra.mrb[0].mxu0 %v747
        %v839 = vpop.f32.mrb[0].mxu0
        %v840 = vadd.f32 0.0, %v839
        %v841 = vpop.f32.mrb[0].mxu0
        %v842 = vpop.f32.mrb[0].mxu0
        %v843 = vadd.f32 0.0, %v842
        %v844 = vpop.f32.mrb[0].mxu0
        %845 = vdwg.mxu0
        %v846 = vmax.f32 %v606, %v784
        %v847 = vmax.f32 %v609, %v787
        %v848 = vmax.f32 %v614, %v792
        %v849 = vmax.f32 %v617, %v795
        %v850 = vmax.f32 %v622, %v800
        %v851 = vmax.f32 %v625, %v803
        %v852 = vmax.f32 %v630, %v808
        %v853 = vmax.f32 %v633, %v811
        %v854 = vmax.f32 %v638, %v816
        %v855 = vmax.f32 %v641, %v819
        %v856 = vmax.f32 %v646, %v824
        %v857 = vmax.f32 %v649, %v827
        %v858 = vmax.f32 %v654, %v832
        %v859 = vmax.f32 %v657, %v835
        %v860 = vmax.f32 %v662, %v840
        %v861 = vmax.f32 %v665, %v843
        %s862 = scalar_lea.vmem %s439, 128 [#allocation2]
        %v863 = vld [vmem:[%s862] sm:$0xf]
        %v864 = vld [vmem:[%s862 + $0x4] sm:$0xf]
        %v865 = vld [vmem:[%s862 + $0x8] sm:$0xf]
        %v866 = vld [vmem:[%s862 + $0xc] sm:$0xf]
        %v867 = vld [vmem:[%s862 + $0x10] sm:$0xf]
        %v868 = vld [vmem:[%s862 + $0x14] sm:$0xf]
        %v869 = vld [vmem:[%s862 + $0x18] sm:$0xf]
        %v870 = vld [vmem:[%s862 + $0x1c] sm:$0xf]
        %v871 = vld [vmem:[%s862 + $0x20] sm:$0xf]
        %v872 = vld [vmem:[%s862 + $0x24] sm:$0xf]
        %v873 = vld [vmem:[%s862 + $0x28] sm:$0xf]
        %v874 = vld [vmem:[%s862 + $0x2c] sm:$0xf]
        %v875 = vld [vmem:[%s862 + $0x30] sm:$0xf]
        %v876 = vld [vmem:[%s862 + $0x34] sm:$0xf]
        %v877 = vld [vmem:[%s862 + $0x38] sm:$0xf]
        %v878 = vld [vmem:[%s862 + $0x3c] sm:$0xf]
        %v895 = vunpack.c.l.b16 %v863
        %v896 = vunpack.c.l.b16 %v864
        %v897 = vunpack.c.l.b16 %v865
        %v898 = vunpack.c.l.b16 %v866
        %v899 = vunpack.c.l.b16 %v867
        %v900 = vunpack.c.l.b16 %v868
        %v901 = vunpack.c.l.b16 %v869
        %v902 = vunpack.c.l.b16 %v870
        %v903 = vunpack.c.l.b16 %v871
        %v904 = vunpack.c.l.b16 %v872
        %v905 = vunpack.c.l.b16 %v873
        %v906 = vunpack.c.l.b16 %v874
        %v907 = vunpack.c.l.b16 %v875
        %v908 = vunpack.c.l.b16 %v876
        %v909 = vunpack.c.l.b16 %v877
        %v910 = vunpack.c.l.b16 %v878
        %v911 = vpack.c.b16 %v896, %v895
        %v912 = vpack.c.b16 %v898, %v897
        %v913 = vpack.c.b16 %v900, %v899
        %v914 = vpack.c.b16 %v902, %v901
        %v915 = vpack.c.b16 %v904, %v903
        %v916 = vpack.c.b16 %v906, %v905
        %v917 = vpack.c.b16 %v908, %v907
        %v918 = vpack.c.b16 %v910, %v909
        %v920 = vsel %vm539, %v911, 0
        %v923 = vsel %vm539, %v912, 0
        %v926 = vsel %vm539, %v913, 0
        %v929 = vsel %vm539, %v914, 0
        %v932 = vsel %vm539, %v915, 0
        %v935 = vsel %vm539, %v916, 0
        %v938 = vsel %vm539, %v917, 0
        %v941 = vsel %vm539, %v918, 0
        %943 = vmatprep.subr.bf16.mxu0 0
        %944 = vmatpush1.bf16.msra.mxu0 %v536
        %945 = vmatprep.subr.bf16.mxu0 0
        %946 = vmatpush1.bf16.msra.mxu0 %v569
        %947 = vmatprep.subr.bf16.mxu0 0
        %948 = vmatpush1.bf16.msra.mxu0 0
        %949 = vmatprep.subr.bf16.mxu0 0
        %950 = vmatpush1.bf16.msra.mxu0 0
        %951 = vmatprep.subr.bf16.mxu0 0
        %952 = vmatpush1.bf16.msra.mxu0 0
        %953 = vmatprep.subr.bf16.mxu0 0
        %954 = vmatpush1.bf16.msra.mxu0 0
        %955 = vmatprep.subr.bf16.mxu0 0
        %956 = vmatpush1.bf16.msra.mxu0 0
        %957 = vmatprep.subr.bf16.mxu0 0
        %958 = vmatpush1.bf16.msra.mxu0 0
        %959 = vmatprep.subr.bf16.mxu0 0
        %960 = vmatpush1.bf16.msra.mxu0 0
        %961 = vmatprep.subr.bf16.mxu0 0
        %962 = vmatpush1.bf16.msra.mxu0 0
        %963 = vmatprep.subr.bf16.mxu0 0
        %964 = vmatpush1.bf16.msra.mxu0 0
        %965 = vmatprep.subr.bf16.mxu0 0
        %966 = vmatpush1.bf16.msra.mxu0 0
        %967 = vmatprep.subr.bf16.mxu0 0
        %968 = vmatpush1.bf16.msra.mxu0 0
        %969 = vmatprep.subr.bf16.mxu0 0
        %970 = vmatpush1.bf16.msra.mxu0 0
        %971 = vmatprep.subr.bf16.mxu0 0
        %972 = vmatpush1.bf16.msra.mxu0 0
        %973 = vmatprep.subr.bf16.mxu0 0
        %974 = vmatpush1.bf16.msra.mxu0 0
        %975 = vmatprep.mubr.bf16.mxu0 0
        %976 = vmatmul.mubr.bf16.gmra.mrb[0].mxu0 %v920
        %v977 = vpop.f32.mrb[0].mxu0
        %v978 = vadd.f32 0.0, %v977
        %v979 = vpop.f32.mrb[0].mxu0
        %v980 = vpop.f32.mrb[0].mxu0
        %v981 = vadd.f32 0.0, %v980
        %v982 = vpop.f32.mrb[0].mxu0
        %983 = vmatprep.mubr.bf16.mxu0 0
        %984 = vmatmul.mubr.bf16.gmra.mrb[0].mxu0 %v923
        %v985 = vpop.f32.mrb[0].mxu0
        %v986 = vadd.f32 0.0, %v985
        %v987 = vpop.f32.mrb[0].mxu0
        %v988 = vpop.f32.mrb[0].mxu0
        %v989 = vadd.f32 0.0, %v988
        %v990 = vpop.f32.mrb[0].mxu0
        %991 = vmatprep.mubr.bf16.mxu0 0
        %992 = vmatmul.mubr.bf16.gmra.mrb[0].mxu0 %v926
        %v993 = vpop.f32.mrb[0].mxu0
        %v994 = vadd.f32 0.0, %v993
        %v995 = vpop.f32.mrb[0].mxu0
        %v996 = vpop.f32.mrb[0].mxu0
        %v997 = vadd.f32 0.0, %v996
        %v998 = vpop.f32.mrb[0].mxu0
        %999 = vmatprep.mubr.bf16.mxu0 0
        %1000 = vmatmul.mubr.bf16.gmra.mrb[0].mxu0 %v929
        %v1001 = vpop.f32.mrb[0].mxu0
        %v1002 = vadd.f32 0.0, %v1001
        %v1003 = vpop.f32.mrb[0].mxu0
        %v1004 = vpop.f32.mrb[0].mxu0
        %v1005 = vadd.f32 0.0, %v1004
        %v1006 = vpop.f32.mrb[0].mxu0
        %1007 = vmatprep.mubr.bf16.mxu0 0
        %1008 = vmatmul.mubr.bf16.gmra.mrb[0].mxu0 %v932
        %v1009 = vpop.f32.mrb[0].mxu0
        %v1010 = vadd.f32 0.0, %v1009
        %v1011 = vpop.f32.mrb[0].mxu0
        %v1012 = vpop.f32.mrb[0].mxu0
        %v1013 = vadd.f32 0.0, %v1012
        %v1014 = vpop.f32.mrb[0].mxu0
        %1015 = vmatprep.mubr.bf16.mxu0 0
        %1016 = vmatmul.mubr.bf16.gmra.mrb[0].mxu0 %v935
        %v1017 = vpop.f32.mrb[0].mxu0
        %v1018 = vadd.f32 0.0, %v1017
        %v1019 = vpop.f32.mrb[0].mxu0
        %v1020 = vpop.f32.mrb[0].mxu0
        %v1021 = vadd.f32 0.0, %v1020
        %v1022 = vpop.f32.mrb[0].mxu0
        %1023 = vmatprep.mubr.bf16.mxu0 0
        %1024 = vmatmul.mubr.bf16.gmra.mrb[0].mxu0 %v938
        %v1025 = vpop.f32.mrb[0].mxu0
        %v1026 = vadd.f32 0.0, %v1025
        %v1027 = vpop.f32.mrb[0].mxu0
        %v1028 = vpop.f32.mrb[0].mxu0
        %v1029 = vadd.f32 0.0, %v1028
        %v1030 = vpop.f32.mrb[0].mxu0
        %1031 = vmatprep.mubr.bf16.mxu0 0
        %1032 = vmatmul.mubr.bf16.gmra.mrb[0].mxu0 %v941
        %v1033 = vpop.f32.mrb[0].mxu0
        %v1034 = vadd.f32 0.0, %v1033
        %v1035 = vpop.f32.mrb[0].mxu0
        %v1036 = vpop.f32.mrb[0].mxu0
        %v1037 = vadd.f32 0.0, %v1036
        %v1038 = vpop.f32.mrb[0].mxu0
        %1039 = vdwg.mxu0
        %v1040 = vmax.f32 %v846, %v978
        %v1041 = vmax.f32 %v847, %v981
        %v1042 = vmax.f32 %v848, %v986
        %v1043 = vmax.f32 %v849, %v989
        %v1044 = vmax.f32 %v850, %v994
        %v1045 = vmax.f32 %v851, %v997
        %v1046 = vmax.f32 %v852, %v1002
        %v1047 = vmax.f32 %v853, %v1005
        %v1048 = vmax.f32 %v854, %v1010
        %v1049 = vmax.f32 %v855, %v1013
        %v1050 = vmax.f32 %v856, %v1018
        %v1051 = vmax.f32 %v857, %v1021
        %v1052 = vmax.f32 %v858, %v1026
        %v1053 = vmax.f32 %v859, %v1029
        %v1054 = vmax.f32 %v860, %v1034
        %v1055 = vmax.f32 %v861, %v1037
        %s1056 = scalar_lea.vmem %s439, 192 [#allocation2]
        %v1057 = vld [vmem:[%s1056] sm:$0xf]
        %v1058 = vld [vmem:[%s1056 + $0x4] sm:$0xf]
        %v1059 = vld [vmem:[%s1056 + $0x8] sm:$0xf]
        %v1060 = vld [vmem:[%s1056 + $0xc] sm:$0xf]
        %v1061 = vld [vmem:[%s1056 + $0x10] sm:$0xf]
        %v1062 = vld [vmem:[%s1056 + $0x14] sm:$0xf]
        %v1063 = vld [vmem:[%s1056 + $0x18] sm:$0xf]
        %v1064 = vld [vmem:[%s1056 + $0x1c] sm:$0xf]
        %v1065 = vld [vmem:[%s1056 + $0x20] sm:$0xf]
        %v1066 = vld [vmem:[%s1056 + $0x24] sm:$0xf]
        %v1067 = vld [vmem:[%s1056 + $0x28] sm:$0xf]
        %v1068 = vld [vmem:[%s1056 + $0x2c] sm:$0xf]
        %v1069 = vld [vmem:[%s1056 + $0x30] sm:$0xf]
        %v1070 = vld [vmem:[%s1056 + $0x34] sm:$0xf]
        %v1071 = vld [vmem:[%s1056 + $0x38] sm:$0xf]
        %v1072 = vld [vmem:[%s1056 + $0x3c] sm:$0xf]
        %v1089 = vunpack.c.l.b16 %v1057
        %v1090 = vunpack.c.l.b16 %v1058
        %v1091 = vunpack.c.l.b16 %v1059
        %v1092 = vunpack.c.l.b16 %v1060
        %v1093 = vunpack.c.l.b16 %v1061
        %v1094 = vunpack.c.l.b16 %v1062
        %v1095 = vunpack.c.l.b16 %v1063
        %v1096 = vunpack.c.l.b16 %v1064
        %v1097 = vunpack.c.l.b16 %v1065
        %v1098 = vunpack.c.l.b16 %v1066
        %v1099 = vunpack.c.l.b16 %v1067
        %v1100 = vunpack.c.l.b16 %v1068
        %v1101 = vunpack.c.l.b16 %v1069
        %v1102 = vunpack.c.l.b16 %v1070
        %v1103 = vunpack.c.l.b16 %v1071
        %v1104 = vunpack.c.l.b16 %v1072
        %v1105 = vpack.c.b16 %v1090, %v1089
        %v1106 = vpack.c.b16 %v1092, %v1091
        %v1107 = vpack.c.b16 %v1094, %v1093
        %v1108 = vpack.c.b16 %v1096, %v1095
        %v1109 = vpack.c.b16 %v1098, %v1097
        %v1110 = vpack.c.b16 %v1100, %v1099
        %v1111 = vpack.c.b16 %v1102, %v1101
        %v1112 = vpack.c.b16 %v1104, %v1103
        %v1114 = vsel %vm539, %v1105, 0
        %v1117 = vsel %vm539, %v1106, 0
        %v1120 = vsel %vm539, %v1107, 0
        %v1123 = vsel %vm539, %v1108, 0
        %v1126 = vsel %vm539, %v1109, 0
        %v1129 = vsel %vm539, %v1110, 0
        %v1132 = vsel %vm539, %v1111, 0
        %v1135 = vsel %vm539, %v1112, 0
        %1137 = vmatprep.subr.bf16.mxu0 0
        %1138 = vmatpush1.bf16.msra.mxu0 %v536
        %1139 = vmatprep.subr.bf16.mxu0 0
        %1140 = vmatpush1.bf16.msra.mxu0 %v569
        %1141 = vmatprep.subr.bf16.mxu0 0
        %1142 = vmatpush1.bf16.msra.mxu0 0
        %1143 = vmatprep.subr.bf16.mxu0 0
        %1144 = vmatpush1.bf16.msra.mxu0 0
        %1145 = vmatprep.subr.bf16.mxu0 0
        %1146 = vmatpush1.bf16.msra.mxu0 0
        %1147 = vmatprep.subr.bf16.mxu0 0
        %1148 = vmatpush1.bf16.msra.mxu0 0
        %1149 = vmatprep.subr.bf16.mxu0 0
        %1150 = vmatpush1.bf16.msra.mxu0 0
        %1151 = vmatprep.subr.bf16.mxu0 0
        %1152 = vmatpush1.bf16.msra.mxu0 0
        %1153 = vmatprep.subr.bf16.mxu0 0
        %1154 = vmatpush1.bf16.msra.mxu0 0
        %1155 = vmatprep.subr.bf16.mxu0 0
        %1156 = vmatpush1.bf16.msra.mxu0 0
        %1157 = vmatprep.subr.bf16.mxu0 0
        %1158 = vmatpush1.bf16.msra.mxu0 0
        %1159 = vmatprep.subr.bf16.mxu0 0
        %1160 = vmatpush1.bf16.msra.mxu0 0
        %1161 = vmatprep.subr.bf16.mxu0 0
        %1162 = vmatpush1.bf16.msra.mxu0 0
        %1163 = vmatprep.subr.bf16.mxu0 0
        %1164 = vmatpush1.bf16.msra.mxu0 0
        %1165 = vmatprep.subr.bf16.mxu0 0
        %1166 = vmatpush1.bf16.msra.mxu0 0
        %1167 = vmatprep.subr.bf16.mxu0 0
        %1168 = vmatpush1.bf16.msra.mxu0 0
        %1169 = vmatprep.mubr.bf16.mxu0 0
        %1170 = vmatmul.mubr.bf16.gmra.mrb[0].mxu0 %v1114
        %v1171 = vpop.f32.mrb[0].mxu0
        %v1172 = vadd.f32 0.0, %v1171
        %v1173 = vpop.f32.mrb[0].mxu0
        %v1174 = vpop.f32.mrb[0].mxu0
        %v1175 = vadd.f32 0.0, %v1174
        %v1176 = vpop.f32.mrb[0].mxu0
        %1177 = vmatprep.mubr.bf16.mxu0 0
        %1178 = vmatmul.mubr.bf16.gmra.mrb[0].mxu0 %v1117
        %v1179 = vpop.f32.mrb[0].mxu0
        %v1180 = vadd.f32 0.0, %v1179
        %v1181 = vpop.f32.mrb[0].mxu0
        %v1182 = vpop.f32.mrb[0].mxu0
        %v1183 = vadd.f32 0.0, %v1182
        %v1184 = vpop.f32.mrb[0].mxu0
        %1185 = vmatprep.mubr.bf16.mxu0 0
        %1186 = vmatmul.mubr.bf16.gmra.mrb[0].mxu0 %v1120
        %v1187 = vpop.f32.mrb[0].mxu0
        %v1188 = vadd.f32 0.0, %v1187
        %v1189 = vpop.f32.mrb[0].mxu0
        %v1190 = vpop.f32.mrb[0].mxu0
        %v1191 = vadd.f32 0.0, %v1190
        %v1192 = vpop.f32.mrb[0].mxu0
        %1193 = vmatprep.mubr.bf16.mxu0 0
        %1194 = vmatmul.mubr.bf16.gmra.mrb[0].mxu0 %v1123
        %v1195 = vpop.f32.mrb[0].mxu0
        %v1196 = vadd.f32 0.0, %v1195
        %v1197 = vpop.f32.mrb[0].mxu0
        %v1198 = vpop.f32.mrb[0].mxu0
        %v1199 = vadd.f32 0.0, %v1198
        %v1200 = vpop.f32.mrb[0].mxu0
        %1201 = vmatprep.mubr.bf16.mxu0 0
        %1202 = vmatmul.mubr.bf16.gmra.mrb[0].mxu0 %v1126
        %v1203 = vpop.f32.mrb[0].mxu0
        %v1204 = vadd.f32 0.0, %v1203
        %v1205 = vpop.f32.mrb[0].mxu0
        %v1206 = vpop.f32.mrb[0].mxu0
        %v1207 = vadd.f32 0.0, %v1206
        %v1208 = vpop.f32.mrb[0].mxu0
        %1209 = vmatprep.mubr.bf16.mxu0 0
        %1210 = vmatmul.mubr.bf16.gmra.mrb[0].mxu0 %v1129
        %v1211 = vpop.f32.mrb[0].mxu0
        %v1212 = vadd.f32 0.0, %v1211
        %v1213 = vpop.f32.mrb[0].mxu0
        %v1214 = vpop.f32.mrb[0].mxu0
        %v1215 = vadd.f32 0.0, %v1214
        %v1216 = vpop.f32.mrb[0].mxu0
        %1217 = vmatprep.mubr.bf16.mxu0 0
        %1218 = vmatmul.mubr.bf16.gmra.mrb[0].mxu0 %v1132
        %v1219 = vpop.f32.mrb[0].mxu0
        %v1220 = vadd.f32 0.0, %v1219
        %v1221 = vpop.f32.mrb[0].mxu0
        %v1222 = vpop.f32.mrb[0].mxu0
        %v1223 = vadd.f32 0.0, %v1222
        %v1224 = vpop.f32.mrb[0].mxu0
        %1225 = vmatprep.mubr.bf16.mxu0 0
        %1226 = vmatmul.mubr.bf16.gmra.mrb[0].mxu0 %v1135
        %v1227 = vpop.f32.mrb[0].mxu0
        %v1228 = vadd.f32 0.0, %v1227
        %v1229 = vpop.f32.mrb[0].mxu0
        %v1230 = vpop.f32.mrb[0].mxu0
        %v1231 = vadd.f32 0.0, %v1230
        %v1232 = vpop.f32.mrb[0].mxu0
        %1233 = vdwg.mxu0
        %v1234 = vmax.f32 %v1040, %v1172
        %v1235 = vmax.f32 %v1041, %v1175
        %v1236 = vmax.f32 %v1042, %v1180
        %v1237 = vmax.f32 %v1043, %v1183
        %v1238 = vmax.f32 %v1044, %v1188
        %v1239 = vmax.f32 %v1045, %v1191
        %v1240 = vmax.f32 %v1046, %v1196
        %v1241 = vmax.f32 %v1047, %v1199
        %v1242 = vmax.f32 %v1048, %v1204
        %v1243 = vmax.f32 %v1049, %v1207
        %v1244 = vmax.f32 %v1050, %v1212
        %v1245 = vmax.f32 %v1051, %v1215
        %v1246 = vmax.f32 %v1052, %v1220
        %v1247 = vmax.f32 %v1053, %v1223
        %v1248 = vmax.f32 %v1054, %v1228
        %v1249 = vmax.f32 %v1055, %v1231
        %v1250 = vld [vmem:[%s2] sm:$0x1]
        %v1252 = vlaneseq
        %v1253 = vshrl.u32 %v1252, 7
        %v1254 = vsub.s32 0, %v1253
        %v1255 = vrot.slane %v1250, %v1254
        %v1257 = vadd.f32 %v1234, %v1255
        %v1258 = vadd.f32 %v1235, %v1255
        %v1259 = vadd.f32 %v1236, %v1255
        %v1260 = vadd.f32 %v1237, %v1255
        %v1261 = vadd.f32 %v1238, %v1255
        %v1262 = vadd.f32 %v1239, %v1255
        %v1263 = vadd.f32 %v1240, %v1255
        %v1264 = vadd.f32 %v1241, %v1255
        %v1265 = vadd.f32 %v1242, %v1255
        %v1266 = vadd.f32 %v1243, %v1255
        %v1267 = vadd.f32 %v1244, %v1255
        %v1268 = vadd.f32 %v1245, %v1255
        %v1269 = vadd.f32 %v1246, %v1255
        %v1270 = vadd.f32 %v1247, %v1255
        %v1271 = vadd.f32 %v1248, %v1255
        %v1272 = vadd.f32 %v1249, %v1255
        %v1273 = vmax.f32 %v1257, 0.0
        %v1274 = vmax.f32 %v1258, 0.0
        %v1275 = vmax.f32 %v1259, 0.0
        %v1276 = vmax.f32 %v1260, 0.0
        %v1277 = vmax.f32 %v1261, 0.0
        %v1278 = vmax.f32 %v1262, 0.0
        %v1279 = vmax.f32 %v1263, 0.0
        %v1280 = vmax.f32 %v1264, 0.0
        %v1281 = vmax.f32 %v1265, 0.0
        %v1282 = vmax.f32 %v1266, 0.0
        %v1283 = vmax.f32 %v1267, 0.0
        %v1284 = vmax.f32 %v1268, 0.0
        %v1285 = vmax.f32 %v1269, 0.0
        %v1286 = vmax.f32 %v1270, 0.0
        %v1287 = vmax.f32 %v1271, 0.0
        %v1288 = vmax.f32 %v1272, 0.0
        %1289 = vst [vmem:[%s465] sm:$0xff] %v1273
        %1290 = vst [vmem:[%s465 + $0x8] sm:$0xff] %v1274
        %1291 = vst [vmem:[%s465 + $0x10] sm:$0xff] %v1275
        %1292 = vst [vmem:[%s465 + $0x18] sm:$0xff] %v1276
        %1293 = vst [vmem:[%s465 + $0x20] sm:$0xff] %v1277
        %1294 = vst [vmem:[%s465 + $0x28] sm:$0xff] %v1278
        %1295 = vst [vmem:[%s465 + $0x30] sm:$0xff] %v1279
        %1296 = vst [vmem:[%s465 + $0x38] sm:$0xff] %v1280
        %1297 = vst [vmem:[%s465 + $0x40] sm:$0xff] %v1281
        %1298 = vst [vmem:[%s465 + $0x48] sm:$0xff] %v1282
        %1299 = vst [vmem:[%s465 + $0x50] sm:$0xff] %v1283
        %1300 = vst [vmem:[%s465 + $0x58] sm:$0xff] %v1284
        %1301 = vst [vmem:[%s465 + $0x60] sm:$0xff] %v1285
        %1302 = vst [vmem:[%s465 + $0x68] sm:$0xff] %v1286
        %1303 = vst [vmem:[%s465 + $0x70] sm:$0xff] %v1287
        %1304 = vst [vmem:[%s465 + $0x78] sm:$0xff] %v1288
        %s1305 = smul.u32 16, %s14
        %p1306 = scmp.lt.s32.totalorder %s1305, 47
        %s1307 = scalar_select %p1306, %s1305, 47
        %s1308 = smul.addr %s1307, 8
        %s1309 = scalar_lea.vmem %s3, %s1308
        // Predicated region
        $region74: #{simple_cnn_forward.3} parent=68 // pred_check
          %p1310 = pneg %p100
        $region75: #{simple_cnn_forward.3} parent=68 // pred_check_branch
          %1312 = sbr.rel (%p1310) target = $region77
        $region76: #{simple_cnn_forward.3} parent=68 // pred_region
          %s1313 = smul.u32 16, %s14
        $region77: #{simple_cnn_forward.3} parent=68 // pred_fallthru
          _
      $region69: #{simple_cnn_forward.3} parent=5 // pred_fallthru
        _
      %p1314 = scmp.le.s32.totalorder 2, %s9
      // Predicated region
      $region78: #{simple_cnn_forward.3} parent=5 // pred_check
        %p1315 = pneg %p1314
      $region79: #{simple_cnn_forward.3} parent=5 // pred_check_branch
        %1317 = sbr.rel (%p1315) target = $region81
      $region80: #{simple_cnn_forward.3} parent=5 // pred_region
        %s1318 = ssub.s32 %s9, 2
        // Predicated region
        $region82: #{simple_cnn_forward.3} parent=80 // pred_check
          %p1319 = pneg %p106
        $region83: #{simple_cnn_forward.3} parent=80 // pred_check_branch
          %1321 = sbr.rel (%p1319) target = $region85
        $region84: #{simple_cnn_forward.3} parent=80 // pred_region
          %s1322 = smul.u32 16, %s15
          %p1323 = scmp.lt.s32.totalorder %s1322, 47
          %s1324 = scalar_select %p1323, %s1322, 47
          %s1325 = smul.addr %s1324, 8
          %s1326 = scalar_lea.vmem %s3, %s1325
        $region85: #{simple_cnn_forward.3} parent=80 // pred_fallthru
          _
      $region81: #{simple_cnn_forward.3} parent=5 // pred_fallthru
        _
    $region6: #{simple_cnn_forward.3} parent=1 // loop_footer
      %s13 = sadd.s32 1, %s9
    $region7: #{simple_cnn_forward.3} parent=1 // loop_footer_branch
      %8 = sbr.rel target = $region3
    $region8: #{simple_cnn_forward.3} parent=1 // loop_exit
      _

// kernel: simple_cnn_forward.4
$region0: #{simple_cnn_forward.4}
  #allocation0 [shape = 'u32[]', space=smem, size = 0x4, offset = 0x4, fixed_abs, tag = 'smem constant byte address 0x4 - core index']
  #allocation1 [shape = 'u32[144,128]{1,0:T(1,128)}', space=vmem, size = 0x12000, scoped, tag = 'internal scratch']
  %s0 = inlined_call_operand.vmem [shape: bf16[4,32,250], index: 0, kind: input, shape index: {}]
  %s1 = inlined_call_operand.vmem [shape: bf16[250,128], index: 1, kind: input, shape index: {}]
  %s2 = inlined_call_operand.vmem [shape: f32[1,128], index: 2, kind: input, shape index: {}]
  %s3 = inlined_call_operand.vmem [shape: f32[32,128], index: 3, kind: output, shape index: {}]
  %s4 = sld [smem:[#allocation0]]
  $region22: #{simple_cnn_forward.4} parent=0
    _
  %s6 = ssub.s32 1, %s4
  %s7 = scalar_select 0, %s6, %s4
  // Predicated region
  $region2: #{simple_cnn_forward.4} parent=0 // pred_check
    _
  $region3: #{simple_cnn_forward.4} parent=0 // pred_check_branch
    %9 = sbr.rel (0) target = $region5
  $region4: #{simple_cnn_forward.4} parent=0 // pred_region
    _
  $region5: #{simple_cnn_forward.4} parent=0 // pred_fallthru
    _
  // Predicated region
  $region6: #{simple_cnn_forward.4} parent=0 // pred_check
    _
  $region7: #{simple_cnn_forward.4} parent=0 // pred_check_branch
    %11 = sbr.rel (0) target = $region9
  $region8: #{simple_cnn_forward.4} parent=0 // pred_region
    _
  $region9: #{simple_cnn_forward.4} parent=0 // pred_fallthru
    _
  // Predicated region
  $region10: #{simple_cnn_forward.4} parent=0 // pred_check
    _
  $region11: #{simple_cnn_forward.4} parent=0 // pred_check_branch
    %13 = sbr.rel (0) target = $region13
  $region12: #{simple_cnn_forward.4} parent=0 // pred_region
    _
  $region13: #{simple_cnn_forward.4} parent=0 // pred_fallthru
    _
  %v15 = vld [vmem:[%s1] sm:$0xf]
  %v16 = vld [vmem:[%s1 + $0x4] sm:$0xf]
  %v17 = vld [vmem:[%s1 + $0x8] sm:$0xf]
  %v18 = vld [vmem:[%s1 + $0xc] sm:$0xf]
  %v19 = vld [vmem:[%s1 + $0x10] sm:$0xf]
  %v20 = vld [vmem:[%s1 + $0x14] sm:$0xf]
  %v21 = vld [vmem:[%s1 + $0x18] sm:$0xf]
  %v22 = vld [vmem:[%s1 + $0x1c] sm:$0xf]
  %v23 = vld [vmem:[%s1 + $0x20] sm:$0xf]
  %v24 = vld [vmem:[%s1 + $0x24] sm:$0xf]
  %v25 = vld [vmem:[%s1 + $0x28] sm:$0xf]
  %v26 = vld [vmem:[%s1 + $0x2c] sm:$0xf]
  %v27 = vld [vmem:[%s1 + $0x30] sm:$0xf]
  %v28 = vld [vmem:[%s1 + $0x34] sm:$0xf]
  %v29 = vld [vmem:[%s1 + $0x38] sm:$0xf]
  %v30 = vld [vmem:[%s1 + $0x3c] sm:$0xf]
  %v31 = vld [vmem:[%s1 + $0x40] sm:$0xf]
  %v32 = vld [vmem:[%s1 + $0x44] sm:$0xf]
  %v33 = vld [vmem:[%s1 + $0x48] sm:$0xf]
  %v34 = vld [vmem:[%s1 + $0x4c] sm:$0xf]
  %v35 = vld [vmem:[%s1 + $0x50] sm:$0xf]
  %v36 = vld [vmem:[%s1 + $0x54] sm:$0xf]
  %v37 = vld [vmem:[%s1 + $0x58] sm:$0xf]
  %v38 = vld [vmem:[%s1 + $0x5c] sm:$0xf]
  %v39 = vld [vmem:[%s1 + $0x60] sm:$0xf]
  %v40 = vld [vmem:[%s1 + $0x64] sm:$0xf]
  %v41 = vld [vmem:[%s1 + $0x68] sm:$0xf]
  %v42 = vld [vmem:[%s1 + $0x6c] sm:$0xf]
  %v43 = vld [vmem:[%s1 + $0x70] sm:$0xf]
  %v44 = vld [vmem:[%s1 + $0x74] sm:$0xf]
  %v45 = vld [vmem:[%s1 + $0x78] sm:$0xf]
  %v46 = vld [vmem:[%s1 + $0x7c] sm:$0x1]
  %v47 = vld [vmem:[%s0] sm:$0xff]
  %v48 = vld [vmem:[%s0 + $0x8] sm:$0xff]
  %v49 = vld [vmem:[%s0 + $0x10] sm:$0xff]
  %v50 = vld [vmem:[%s0 + $0x18] sm:$0xff]
  %v55 = vunpack.c.l.b16 %v47
  %v56 = vunpack.c.h.b16 %v47
  %v57 = vunpack.c.l.b16 %v48
  %v58 = vunpack.c.h.b16 %v48
  %v59 = vunpack.c.l.b16 %v49
  %v60 = vunpack.c.h.b16 %v49
  %v61 = vunpack.c.l.b16 %v50
  %v62 = vunpack.c.h.b16 %v50
  %v63 = vpack.c.b16 %v57, %v55
  %v64 = vpack.c.b16 %v58, %v56
  %v65 = vpack.c.b16 %v61, %v59
  %v66 = vpack.c.b16 %v62, %v60
  %v101 = vunpack.c.l.b16 %v15
  %v102 = vunpack.c.l.b16 %v16
  %v103 = vunpack.c.l.b16 %v17
  %v104 = vunpack.c.l.b16 %v18
  %v105 = vunpack.c.l.b16 %v19
  %v106 = vunpack.c.l.b16 %v20
  %v107 = vunpack.c.l.b16 %v21
  %v108 = vunpack.c.l.b16 %v22
  %v109 = vunpack.c.l.b16 %v23
  %v110 = vunpack.c.l.b16 %v24
  %v111 = vunpack.c.l.b16 %v25
  %v112 = vunpack.c.l.b16 %v26
  %v113 = vunpack.c.l.b16 %v27
  %v114 = vunpack.c.l.b16 %v28
  %v115 = vunpack.c.l.b16 %v29
  %v116 = vunpack.c.l.b16 %v30
  %v117 = vunpack.c.l.b16 %v31
  %v118 = vunpack.c.l.b16 %v32
  %v119 = vunpack.c.l.b16 %v33
  %v120 = vunpack.c.l.b16 %v34
  %v121 = vunpack.c.l.b16 %v35
  %v122 = vunpack.c.l.b16 %v36
  %v123 = vunpack.c.l.b16 %v37
  %v124 = vunpack.c.l.b16 %v38
  %v125 = vunpack.c.l.b16 %v39
  %v126 = vunpack.c.l.b16 %v40
  %v127 = vunpack.c.l.b16 %v41
  %v128 = vunpack.c.l.b16 %v42
  %v129 = vunpack.c.l.b16 %v43
  %v130 = vunpack.c.l.b16 %v44
  %v131 = vunpack.c.l.b16 %v45
  %v132 = vunpack.c.l.b16 %v46
  %v133 = vpack.c.b16 %v102, %v101
  %v134 = vpack.c.b16 %v104, %v103
  %v135 = vpack.c.b16 %v106, %v105
  %v136 = vpack.c.b16 %v108, %v107
  %v137 = vpack.c.b16 %v110, %v109
  %v138 = vpack.c.b16 %v112, %v111
  %v139 = vpack.c.b16 %v114, %v113
  %v140 = vpack.c.b16 %v116, %v115
  %v141 = vpack.c.b16 %v118, %v117
  %v142 = vpack.c.b16 %v120, %v119
  %v143 = vpack.c.b16 %v122, %v121
  %v144 = vpack.c.b16 %v124, %v123
  %v145 = vpack.c.b16 %v126, %v125
  %v146 = vpack.c.b16 %v128, %v127
  %v147 = vpack.c.b16 %v130, %v129
  %v148 = vpack.c.b16 %v132, %v131
  %vm164 = vcmask 998400
  %v166 = vsel %vm164, %v64, 0
  %v169 = vsel %vm164, %v66, 0
  %vm171 = vcmask 1044480
  %v173 = vsel %vm171, %v148, 0
  %175 = vmatprep.subr.bf16.mxu0 0
  %176 = vmatpush1.bf16.msra.mxu0 %v133
  %177 = vmatprep.subr.bf16.mxu0 0
  %178 = vmatpush1.bf16.msra.mxu0 %v134
  %179 = vmatprep.subr.bf16.mxu0 0
  %180 = vmatpush1.bf16.msra.mxu0 %v135
  %181 = vmatprep.subr.bf16.mxu0 0
  %182 = vmatpush1.bf16.msra.mxu0 %v136
  %183 = vmatprep.subr.bf16.mxu0 0
  %184 = vmatpush1.bf16.msra.mxu0 %v137
  %185 = vmatprep.subr.bf16.mxu0 0
  %186 = vmatpush1.bf16.msra.mxu0 %v138
  %187 = vmatprep.subr.bf16.mxu0 0
  %188 = vmatpush1.bf16.msra.mxu0 %v139
  %189 = vmatprep.subr.bf16.mxu0 0
  %190 = vmatpush1.bf16.msra.mxu0 %v140
  %191 = vmatprep.subr.bf16.mxu0 0
  %192 = vmatpush1.bf16.msra.mxu0 %v141
  %193 = vmatprep.subr.bf16.mxu0 0
  %194 = vmatpush1.bf16.msra.mxu0 %v142
  %195 = vmatprep.subr.bf16.mxu0 0
  %196 = vmatpush1.bf16.msra.mxu0 %v143
  %197 = vmatprep.subr.bf16.mxu0 0
  %198 = vmatpush1.bf16.msra.mxu0 %v144
  %199 = vmatprep.subr.bf16.mxu0 0
  %200 = vmatpush1.bf16.msra.mxu0 %v145
  %201 = vmatprep.subr.bf16.mxu0 0
  %202 = vmatpush1.bf16.msra.mxu0 %v146
  %203 = vmatprep.subr.bf16.mxu0 0
  %204 = vmatpush1.bf16.msra.mxu0 %v147
  %205 = vmatprep.subr.bf16.mxu0 0
  %206 = vmatpush1.bf16.msra.mxu0 %v173
  %207 = vmatprep.mubr.bf16.mxu0 %v166
  %208 = vmatmul.mubr.bf16.gmra.mrb[0].mxu0 %v63
  %v209 = vpop.f32.mrb[0].mxu0
  %v210 = vadd.f32 0.0, %v209
  %v211 = vpop.f32.mrb[0].mxu0
  %v212 = vpop.f32.mrb[0].mxu0
  %v213 = vadd.f32 0.0, %v212
  %v214 = vpop.f32.mrb[0].mxu0
  %215 = vmatprep.mubr.bf16.mxu0 %v169
  %216 = vmatmul.mubr.bf16.gmra.mrb[0].mxu0 %v65
  %v217 = vpop.f32.mrb[0].mxu0
  %v218 = vadd.f32 0.0, %v217
  %v219 = vpop.f32.mrb[0].mxu0
  %v220 = vpop.f32.mrb[0].mxu0
  %v221 = vadd.f32 0.0, %v220
  %v222 = vpop.f32.mrb[0].mxu0
  %223 = vdwg.mxu0
  %s224 = scalar_lea.vmem %s0, 32
  %v225 = vld [vmem:[%s224] sm:$0xff]
  %v226 = vld [vmem:[%s224 + $0x8] sm:$0xff]
  %v227 = vld [vmem:[%s224 + $0x10] sm:$0xff]
  %v228 = vld [vmem:[%s224 + $0x18] sm:$0xff]
  %v233 = vunpack.c.l.b16 %v225
  %v234 = vunpack.c.h.b16 %v225
  %v235 = vunpack.c.l.b16 %v226
  %v236 = vunpack.c.h.b16 %v226
  %v237 = vunpack.c.l.b16 %v227
  %v238 = vunpack.c.h.b16 %v227
  %v239 = vunpack.c.l.b16 %v228
  %v240 = vunpack.c.h.b16 %v228
  %v241 = vpack.c.b16 %v235, %v233
  %v242 = vpack.c.b16 %v236, %v234
  %v243 = vpack.c.b16 %v239, %v237
  %v244 = vpack.c.b16 %v240, %v238
  %v248 = vsel %vm164, %v242, 0
  %v251 = vsel %vm164, %v244, 0
  %253 = vmatprep.subr.bf16.mxu0 0
  %254 = vmatpush1.bf16.msra.mxu0 %v133
  %255 = vmatprep.subr.bf16.mxu0 0
  %256 = vmatpush1.bf16.msra.mxu0 %v134
  %257 = vmatprep.subr.bf16.mxu0 0
  %258 = vmatpush1.bf16.msra.mxu0 %v135
  %259 = vmatprep.subr.bf16.mxu0 0
  %260 = vmatpush1.bf16.msra.mxu0 %v136
  %261 = vmatprep.subr.bf16.mxu0 0
  %262 = vmatpush1.bf16.msra.mxu0 %v137
  %263 = vmatprep.subr.bf16.mxu0 0
  %264 = vmatpush1.bf16.msra.mxu0 %v138
  %265 = vmatprep.subr.bf16.mxu0 0
  %266 = vmatpush1.bf16.msra.mxu0 %v139
  %267 = vmatprep.subr.bf16.mxu0 0
  %268 = vmatpush1.bf16.msra.mxu0 %v140
  %269 = vmatprep.subr.bf16.mxu0 0
  %270 = vmatpush1.bf16.msra.mxu0 %v141
  %271 = vmatprep.subr.bf16.mxu0 0
  %272 = vmatpush1.bf16.msra.mxu0 %v142
  %273 = vmatprep.subr.bf16.mxu0 0
  %274 = vmatpush1.bf16.msra.mxu0 %v143
  %275 = vmatprep.subr.bf16.mxu0 0
  %276 = vmatpush1.bf16.msra.mxu0 %v144
  %277 = vmatprep.subr.bf16.mxu0 0
  %278 = vmatpush1.bf16.msra.mxu0 %v145
  %279 = vmatprep.subr.bf16.mxu0 0
  %280 = vmatpush1.bf16.msra.mxu0 %v146
  %281 = vmatprep.subr.bf16.mxu0 0
  %282 = vmatpush1.bf16.msra.mxu0 %v147
  %283 = vmatprep.subr.bf16.mxu0 0
  %284 = vmatpush1.bf16.msra.mxu0 %v173
  %285 = vmatprep.mubr.bf16.mxu0 %v248
  %286 = vmatmul.mubr.bf16.gmra.mrb[0].mxu0 %v241
  %v287 = vpop.f32.mrb[0].mxu0
  %v288 = vadd.f32 0.0, %v287
  %v289 = vpop.f32.mrb[0].mxu0
  %v290 = vpop.f32.mrb[0].mxu0
  %v291 = vadd.f32 0.0, %v290
  %v292 = vpop.f32.mrb[0].mxu0
  %293 = vmatprep.mubr.bf16.mxu0 %v251
  %294 = vmatmul.mubr.bf16.gmra.mrb[0].mxu0 %v243
  %v295 = vpop.f32.mrb[0].mxu0
  %v296 = vadd.f32 0.0, %v295
  %v297 = vpop.f32.mrb[0].mxu0
  %v298 = vpop.f32.mrb[0].mxu0
  %v299 = vadd.f32 0.0, %v298
  %v300 = vpop.f32.mrb[0].mxu0
  %301 = vdwg.mxu0
  %v302 = vmax.f32 %v210, %v288
  %v303 = vmax.f32 %v213, %v291
  %v304 = vmax.f32 %v218, %v296
  %v305 = vmax.f32 %v221, %v299
  %s306 = scalar_lea.vmem %s0, 64
  %v307 = vld [vmem:[%s306] sm:$0xff]
  %v308 = vld [vmem:[%s306 + $0x8] sm:$0xff]
  %v309 = vld [vmem:[%s306 + $0x10] sm:$0xff]
  %v310 = vld [vmem:[%s306 + $0x18] sm:$0xff]
  %v315 = vunpack.c.l.b16 %v307
  %v316 = vunpack.c.h.b16 %v307
  %v317 = vunpack.c.l.b16 %v308
  %v318 = vunpack.c.h.b16 %v308
  %v319 = vunpack.c.l.b16 %v309
  %v320 = vunpack.c.h.b16 %v309
  %v321 = vunpack.c.l.b16 %v310
  %v322 = vunpack.c.h.b16 %v310
  %v323 = vpack.c.b16 %v317, %v315
  %v324 = vpack.c.b16 %v318, %v316
  %v325 = vpack.c.b16 %v321, %v319
  %v326 = vpack.c.b16 %v322, %v320
  %v330 = vsel %vm164, %v324, 0
  %v333 = vsel %vm164, %v326, 0
  %335 = vmatprep.subr.bf16.mxu0 0
  %336 = vmatpush1.bf16.msra.mxu0 %v133
  %337 = vmatprep.subr.bf16.mxu0 0
  %338 = vmatpush1.bf16.msra.mxu0 %v134
  %339 = vmatprep.subr.bf16.mxu0 0
  %340 = vmatpush1.bf16.msra.mxu0 %v135
  %341 = vmatprep.subr.bf16.mxu0 0
  %342 = vmatpush1.bf16.msra.mxu0 %v136
  %343 = vmatprep.subr.bf16.mxu0 0
  %344 = vmatpush1.bf16.msra.mxu0 %v137
  %345 = vmatprep.subr.bf16.mxu0 0
  %346 = vmatpush1.bf16.msra.mxu0 %v138
  %347 = vmatprep.subr.bf16.mxu0 0
  %348 = vmatpush1.bf16.msra.mxu0 %v139
  %349 = vmatprep.subr.bf16.mxu0 0
  %350 = vmatpush1.bf16.msra.mxu0 %v140
  %351 = vmatprep.subr.bf16.mxu0 0
  %352 = vmatpush1.bf16.msra.mxu0 %v141
  %353 = vmatprep.subr.bf16.mxu0 0
  %354 = vmatpush1.bf16.msra.mxu0 %v142
  %355 = vmatprep.subr.bf16.mxu0 0
  %356 = vmatpush1.bf16.msra.mxu0 %v143
  %357 = vmatprep.subr.bf16.mxu0 0
  %358 = vmatpush1.bf16.msra.mxu0 %v144
  %359 = vmatprep.subr.bf16.mxu0 0
  %360 = vmatpush1.bf16.msra.mxu0 %v145
  %361 = vmatprep.subr.bf16.mxu0 0
  %362 = vmatpush1.bf16.msra.mxu0 %v146
  %363 = vmatprep.subr.bf16.mxu0 0
  %364 = vmatpush1.bf16.msra.mxu0 %v147
  %365 = vmatprep.subr.bf16.mxu0 0
  %366 = vmatpush1.bf16.msra.mxu0 %v173
  %367 = vmatprep.mubr.bf16.mxu0 %v330
  %368 = vmatmul.mubr.bf16.gmra.mrb[0].mxu0 %v323
  %v369 = vpop.f32.mrb[0].mxu0
  %v370 = vadd.f32 0.0, %v369
  %v371 = vpop.f32.mrb[0].mxu0
  %v372 = vpop.f32.mrb[0].mxu0
  %v373 = vadd.f32 0.0, %v372
  %v374 = vpop.f32.mrb[0].mxu0
  %375 = vmatprep.mubr.bf16.mxu0 %v333
  %376 = vmatmul.mubr.bf16.gmra.mrb[0].mxu0 %v325
  %v377 = vpop.f32.mrb[0].mxu0
  %v378 = vadd.f32 0.0, %v377
  %v379 = vpop.f32.mrb[0].mxu0
  %v380 = vpop.f32.mrb[0].mxu0
  %v381 = vadd.f32 0.0, %v380
  %v382 = vpop.f32.mrb[0].mxu0
  %383 = vdwg.mxu0
  %v384 = vmax.f32 %v302, %v370
  %v385 = vmax.f32 %v303, %v373
  %v386 = vmax.f32 %v304, %v378
  %v387 = vmax.f32 %v305, %v381
  %s388 = scalar_lea.vmem %s0, 96
  %v389 = vld [vmem:[%s388] sm:$0xff]
  %v390 = vld [vmem:[%s388 + $0x8] sm:$0xff]
  %v391 = vld [vmem:[%s388 + $0x10] sm:$0xff]
  %v392 = vld [vmem:[%s388 + $0x18] sm:$0xff]
  %v397 = vunpack.c.l.b16 %v389
  %v398 = vunpack.c.h.b16 %v389
  %v399 = vunpack.c.l.b16 %v390
  %v400 = vunpack.c.h.b16 %v390
  %v401 = vunpack.c.l.b16 %v391
  %v402 = vunpack.c.h.b16 %v391
  %v403 = vunpack.c.l.b16 %v392
  %v404 = vunpack.c.h.b16 %v392
  %v405 = vpack.c.b16 %v399, %v397
  %v406 = vpack.c.b16 %v400, %v398
  %v407 = vpack.c.b16 %v403, %v401
  %v408 = vpack.c.b16 %v404, %v402
  %v412 = vsel %vm164, %v406, 0
  %v415 = vsel %vm164, %v408, 0
  %417 = vmatprep.subr.bf16.mxu0 0
  %418 = vmatpush1.bf16.msra.mxu0 %v133
  %419 = vmatprep.subr.bf16.mxu0 0
  %420 = vmatpush1.bf16.msra.mxu0 %v134
  %421 = vmatprep.subr.bf16.mxu0 0
  %422 = vmatpush1.bf16.msra.mxu0 %v135
  %423 = vmatprep.subr.bf16.mxu0 0
  %424 = vmatpush1.bf16.msra.mxu0 %v136
  %425 = vmatprep.subr.bf16.mxu0 0
  %426 = vmatpush1.bf16.msra.mxu0 %v137
  %427 = vmatprep.subr.bf16.mxu0 0
  %428 = vmatpush1.bf16.msra.mxu0 %v138
  %429 = vmatprep.subr.bf16.mxu0 0
  %430 = vmatpush1.bf16.msra.mxu0 %v139
  %431 = vmatprep.subr.bf16.mxu0 0
  %432 = vmatpush1.bf16.msra.mxu0 %v140
  %433 = vmatprep.subr.bf16.mxu0 0
  %434 = vmatpush1.bf16.msra.mxu0 %v141
  %435 = vmatprep.subr.bf16.mxu0 0
  %436 = vmatpush1.bf16.msra.mxu0 %v142
  %437 = vmatprep.subr.bf16.mxu0 0
  %438 = vmatpush1.bf16.msra.mxu0 %v143
  %439 = vmatprep.subr.bf16.mxu0 0
  %440 = vmatpush1.bf16.msra.mxu0 %v144
  %441 = vmatprep.subr.bf16.mxu0 0
  %442 = vmatpush1.bf16.msra.mxu0 %v145
  %443 = vmatprep.subr.bf16.mxu0 0
  %444 = vmatpush1.bf16.msra.mxu0 %v146
  %445 = vmatprep.subr.bf16.mxu0 0
  %446 = vmatpush1.bf16.msra.mxu0 %v147
  %447 = vmatprep.subr.bf16.mxu0 0
  %448 = vmatpush1.bf16.msra.mxu0 %v173
  %449 = vmatprep.mubr.bf16.mxu0 %v412
  %450 = vmatmul.mubr.bf16.gmra.mrb[0].mxu0 %v405
  %v451 = vpop.f32.mrb[0].mxu0
  %v452 = vadd.f32 0.0, %v451
  %v453 = vpop.f32.mrb[0].mxu0
  %v454 = vpop.f32.mrb[0].mxu0
  %v455 = vadd.f32 0.0, %v454
  %v456 = vpop.f32.mrb[0].mxu0
  %457 = vmatprep.mubr.bf16.mxu0 %v415
  %458 = vmatmul.mubr.bf16.gmra.mrb[0].mxu0 %v407
  %v459 = vpop.f32.mrb[0].mxu0
  %v460 = vadd.f32 0.0, %v459
  %v461 = vpop.f32.mrb[0].mxu0
  %v462 = vpop.f32.mrb[0].mxu0
  %v463 = vadd.f32 0.0, %v462
  %v464 = vpop.f32.mrb[0].mxu0
  %465 = vdwg.mxu0
  %v466 = vmax.f32 %v384, %v452
  %v467 = vmax.f32 %v385, %v455
  %v468 = vmax.f32 %v386, %v460
  %v469 = vmax.f32 %v387, %v463
  %v470 = vld [vmem:[%s2] sm:$0x1]
  %v472 = vlaneseq
  %v473 = vshrl.u32 %v472, 7
  %v474 = vsub.s32 0, %v473
  %v475 = vrot.slane %v470, %v474
  %v477 = vadd.f32 %v466, %v475
  %v478 = vadd.f32 %v467, %v475
  %v479 = vadd.f32 %v468, %v475
  %v480 = vadd.f32 %v469, %v475
  %v481 = vmax.f32 %v477, 0.0
  %v482 = vmax.f32 %v478, 0.0
  %v483 = vmax.f32 %v479, 0.0
  %v484 = vmax.f32 %v480, 0.0
  %485 = vst [vmem:[%s3] sm:$0xff] %v481
  %486 = vst [vmem:[%s3 + $0x8] sm:$0xff] %v482
  %487 = vst [vmem:[%s3 + $0x10] sm:$0xff] %v483
  %488 = vst [vmem:[%s3 + $0x18] sm:$0xff] %v484
  // Predicated region
  $region14: #{simple_cnn_forward.4} parent=0 // pred_check
    _
  $region15: #{simple_cnn_forward.4} parent=0 // pred_check_branch
    %490 = sbr.rel (0) target = $region17
  $region16: #{simple_cnn_forward.4} parent=0 // pred_region
    _
  $region17: #{simple_cnn_forward.4} parent=0 // pred_fallthru
    _
  // Predicated region
  $region18: #{simple_cnn_forward.4} parent=0 // pred_check
    _
  $region19: #{simple_cnn_forward.4} parent=0 // pred_check_branch
    %492 = sbr.rel (0) target = $region21
  $region20: #{simple_cnn_forward.4} parent=0 // pred_region
    _
  $region21: #{simple_cnn_forward.4} parent=0 // pred_fallthru
    _

// kernel: simple_cnn_forward.5
$region0: #{simple_cnn_forward.5}
  #allocation0 [shape = 'u32[]', space=smem, size = 0x4, offset = 0x4, fixed_abs, tag = 'smem constant byte address 0x4 - core index']
  #allocation1 [shape = 'u32[144,128]{1,0:T(1,128)}', space=vmem, size = 0x12000, scoped, tag = 'internal scratch']
  %s0 = inlined_call_operand.vmem [shape: bf16[8,320], index: 0, kind: input, shape index: {}]
  %s1 = inlined_call_operand.vmem [shape: bf16[320,128], index: 1, kind: input, shape index: {}]
  %s2 = inlined_call_operand.vmem [shape: f32[1,128], index: 2, kind: input, shape index: {}]
  %s3 = inlined_call_operand.vmem [shape: bf16[128,128], index: 3, kind: input, shape index: {}]
  %s4 = inlined_call_operand.vmem [shape: f32[1,128], index: 4, kind: input, shape index: {}]
  %s5 = inlined_call_operand.vmem [shape: f32[8,128], index: 5, kind: output, shape index: {}]
  %s6 = sld [smem:[#allocation0]]
  $region30: #{simple_cnn_forward.5} parent=0
    _
  %s8 = ssub.s32 1, %s6
  %s9 = scalar_select 0, %s8, %s6
  // Predicated region
  $region2: #{simple_cnn_forward.5} parent=0 // pred_check
    _
  $region3: #{simple_cnn_forward.5} parent=0 // pred_check_branch
    %11 = sbr.rel (0) target = $region5
  $region4: #{simple_cnn_forward.5} parent=0 // pred_region
    _
  $region5: #{simple_cnn_forward.5} parent=0 // pred_fallthru
    _
  // Predicated region
  $region6: #{simple_cnn_forward.5} parent=0 // pred_check
    _
  $region7: #{simple_cnn_forward.5} parent=0 // pred_check_branch
    %13 = sbr.rel (0) target = $region9
  $region8: #{simple_cnn_forward.5} parent=0 // pred_region
    _
  $region9: #{simple_cnn_forward.5} parent=0 // pred_fallthru
    _
  // Predicated region
  $region10: #{simple_cnn_forward.5} parent=0 // pred_check
    _
  $region11: #{simple_cnn_forward.5} parent=0 // pred_check_branch
    %15 = sbr.rel (0) target = $region13
  $region12: #{simple_cnn_forward.5} parent=0 // pred_region
    _
  $region13: #{simple_cnn_forward.5} parent=0 // pred_fallthru
    _
  // Predicated region
  $region14: #{simple_cnn_forward.5} parent=0 // pred_check
    _
  $region15: #{simple_cnn_forward.5} parent=0 // pred_check_branch
    %17 = sbr.rel (0) target = $region17
  $region16: #{simple_cnn_forward.5} parent=0 // pred_region
    _
  $region17: #{simple_cnn_forward.5} parent=0 // pred_fallthru
    _
  // Predicated region
  $region18: #{simple_cnn_forward.5} parent=0 // pred_check
    _
  $region19: #{simple_cnn_forward.5} parent=0 // pred_check_branch
    %19 = sbr.rel (0) target = $region21
  $region20: #{simple_cnn_forward.5} parent=0 // pred_region
    _
  $region21: #{simple_cnn_forward.5} parent=0 // pred_fallthru
    _
  %v21 = vld [vmem:[%s0] sm:$0xff]
  %v22 = vld [vmem:[%s0 + $0x8] sm:$0xf]
  %v23 = vld [vmem:[%s1] sm:$0xf]
  %v24 = vld [vmem:[%s1 + $0x4] sm:$0xf]
  %v25 = vld [vmem:[%s1 + $0x8] sm:$0xf]
  %v26 = vld [vmem:[%s1 + $0xc] sm:$0xf]
  %v27 = vld [vmem:[%s1 + $0x10] sm:$0xf]
  %v28 = vld [vmem:[%s1 + $0x14] sm:$0xf]
  %v29 = vld [vmem:[%s1 + $0x18] sm:$0xf]
  %v30 = vld [vmem:[%s1 + $0x1c] sm:$0xf]
  %v31 = vld [vmem:[%s1 + $0x20] sm:$0xf]
  %v32 = vld [vmem:[%s1 + $0x24] sm:$0xf]
  %v33 = vld [vmem:[%s1 + $0x28] sm:$0xf]
  %v34 = vld [vmem:[%s1 + $0x2c] sm:$0xf]
  %v35 = vld [vmem:[%s1 + $0x30] sm:$0xf]
  %v36 = vld [vmem:[%s1 + $0x34] sm:$0xf]
  %v37 = vld [vmem:[%s1 + $0x38] sm:$0xf]
  %v38 = vld [vmem:[%s1 + $0x3c] sm:$0xf]
  %v39 = vld [vmem:[%s1 + $0x40] sm:$0xf]
  %v40 = vld [vmem:[%s1 + $0x44] sm:$0xf]
  %v41 = vld [vmem:[%s1 + $0x48] sm:$0xf]
  %v42 = vld [vmem:[%s1 + $0x4c] sm:$0xf]
  %v43 = vld [vmem:[%s1 + $0x50] sm:$0xf]
  %v44 = vld [vmem:[%s1 + $0x54] sm:$0xf]
  %v45 = vld [vmem:[%s1 + $0x58] sm:$0xf]
  %v46 = vld [vmem:[%s1 + $0x5c] sm:$0xf]
  %v47 = vld [vmem:[%s1 + $0x60] sm:$0xf]
  %v48 = vld [vmem:[%s1 + $0x64] sm:$0xf]
  %v49 = vld [vmem:[%s1 + $0x68] sm:$0xf]
  %v50 = vld [vmem:[%s1 + $0x6c] sm:$0xf]
  %v51 = vld [vmem:[%s1 + $0x70] sm:$0xf]
  %v52 = vld [vmem:[%s1 + $0x74] sm:$0xf]
  %v53 = vld [vmem:[%s1 + $0x78] sm:$0xf]
  %v54 = vld [vmem:[%s1 + $0x7c] sm:$0xf]
  %v55 = vld [vmem:[%s1 + $0x80] sm:$0xf]
  %v56 = vld [vmem:[%s1 + $0x84] sm:$0xf]
  %v57 = vld [vmem:[%s1 + $0x88] sm:$0xf]
  %v58 = vld [vmem:[%s1 + $0x8c] sm:$0xf]
  %v59 = vld [vmem:[%s1 + $0x90] sm:$0xf]
  %v60 = vld [vmem:[%s1 + $0x94] sm:$0xf]
  %v61 = vld [vmem:[%s1 + $0x98] sm:$0xf]
  %v62 = vld [vmem:[%s1 + $0x9c] sm:$0xf]
  %v63 = vld [vmem:[%s2] sm:$0x1]
  %v65 = vlaneseq
  %v66 = vshrl.u32 %v65, 7
  %v67 = vsub.s32 0, %v66
  %v68 = vrot.slane %v63, %v67
  %v72 = vunpack.c.l.b16 %v21
  %v73 = vunpack.c.h.b16 %v21
  %v74 = vunpack.c.l.b16 %v22
  %v75 = vpack.c.b16 %v72, %v72
  %v76 = vpack.c.b16 %v73, %v73
  %v77 = vpack.c.b16 %v74, %v74
  %v120 = vunpack.c.l.b16 %v23
  %v121 = vunpack.c.l.b16 %v24
  %v122 = vunpack.c.l.b16 %v25
  %v123 = vunpack.c.l.b16 %v26
  %v124 = vunpack.c.l.b16 %v27
  %v125 = vunpack.c.l.b16 %v28
  %v126 = vunpack.c.l.b16 %v29
  %v127 = vunpack.c.l.b16 %v30
  %v128 = vunpack.c.l.b16 %v31
  %v129 = vunpack.c.l.b16 %v32
  %v130 = vunpack.c.l.b16 %v33
  %v131 = vunpack.c.l.b16 %v34
  %v132 = vunpack.c.l.b16 %v35
  %v133 = vunpack.c.l.b16 %v36
  %v134 = vunpack.c.l.b16 %v37
  %v135 = vunpack.c.l.b16 %v38
  %v136 = vunpack.c.l.b16 %v39
  %v137 = vunpack.c.l.b16 %v40
  %v138 = vunpack.c.l.b16 %v41
  %v139 = vunpack.c.l.b16 %v42
  %v140 = vunpack.c.l.b16 %v43
  %v141 = vunpack.c.l.b16 %v44
  %v142 = vunpack.c.l.b16 %v45
  %v143 = vunpack.c.l.b16 %v46
  %v144 = vunpack.c.l.b16 %v47
  %v145 = vunpack.c.l.b16 %v48
  %v146 = vunpack.c.l.b16 %v49
  %v147 = vunpack.c.l.b16 %v50
  %v148 = vunpack.c.l.b16 %v51
  %v149 = vunpack.c.l.b16 %v52
  %v150 = vunpack.c.l.b16 %v53
  %v151 = vunpack.c.l.b16 %v54
  %v152 = vunpack.c.l.b16 %v55
  %v153 = vunpack.c.l.b16 %v56
  %v154 = vunpack.c.l.b16 %v57
  %v155 = vunpack.c.l.b16 %v58
  %v156 = vunpack.c.l.b16 %v59
  %v157 = vunpack.c.l.b16 %v60
  %v158 = vunpack.c.l.b16 %v61
  %v159 = vunpack.c.l.b16 %v62
  %v160 = vpack.c.b16 %v121, %v120
  %v161 = vpack.c.b16 %v123, %v122
  %v162 = vpack.c.b16 %v125, %v124
  %v163 = vpack.c.b16 %v127, %v126
  %v164 = vpack.c.b16 %v129, %v128
  %v165 = vpack.c.b16 %v131, %v130
  %v166 = vpack.c.b16 %v133, %v132
  %v167 = vpack.c.b16 %v135, %v134
  %v168 = vpack.c.b16 %v137, %v136
  %v169 = vpack.c.b16 %v139, %v138
  %v170 = vpack.c.b16 %v141, %v140
  %v171 = vpack.c.b16 %v143, %v142
  %v172 = vpack.c.b16 %v145, %v144
  %v173 = vpack.c.b16 %v147, %v146
  %v174 = vpack.c.b16 %v149, %v148
  %v175 = vpack.c.b16 %v151, %v150
  %v176 = vpack.c.b16 %v153, %v152
  %v177 = vpack.c.b16 %v155, %v154
  %v178 = vpack.c.b16 %v157, %v156
  %v179 = vpack.c.b16 %v159, %v158
  %vm200 = vcmask 523264
  %v202 = vsel %vm200, %v77, 0
  %204 = vmatprep.subr.bf16.mxu0 0
  %205 = vmatpush1.bf16.msra.mxu0 %v160
  %206 = vmatprep.subr.bf16.mxu0 0
  %207 = vmatpush1.bf16.msra.mxu0 %v161
  %208 = vmatprep.subr.bf16.mxu0 0
  %209 = vmatpush1.bf16.msra.mxu0 %v162
  %210 = vmatprep.subr.bf16.mxu0 0
  %211 = vmatpush1.bf16.msra.mxu0 %v163
  %212 = vmatprep.subr.bf16.mxu0 0
  %213 = vmatpush1.bf16.msra.mxu0 %v164
  %214 = vmatprep.subr.bf16.mxu0 0
  %215 = vmatpush1.bf16.msra.mxu0 %v165
  %216 = vmatprep.subr.bf16.mxu0 0
  %217 = vmatpush1.bf16.msra.mxu0 %v166
  %218 = vmatprep.subr.bf16.mxu0 0
  %219 = vmatpush1.bf16.msra.mxu0 %v167
  %220 = vmatprep.subr.bf16.mxu0 0
  %221 = vmatpush1.bf16.msra.mxu0 %v168
  %222 = vmatprep.subr.bf16.mxu0 0
  %223 = vmatpush1.bf16.msra.mxu0 %v169
  %224 = vmatprep.subr.bf16.mxu0 0
  %225 = vmatpush1.bf16.msra.mxu0 %v170
  %226 = vmatprep.subr.bf16.mxu0 0
  %227 = vmatpush1.bf16.msra.mxu0 %v171
  %228 = vmatprep.subr.bf16.mxu0 0
  %229 = vmatpush1.bf16.msra.mxu0 %v172
  %230 = vmatprep.subr.bf16.mxu0 0
  %231 = vmatpush1.bf16.msra.mxu0 %v173
  %232 = vmatprep.subr.bf16.mxu0 0
  %233 = vmatpush1.bf16.msra.mxu0 %v174
  %234 = vmatprep.subr.bf16.mxu0 0
  %235 = vmatpush1.bf16.msra.mxu0 %v175
  %236 = vmatprep.mubr.bf16.mxu0 %v76
  %237 = vmatmul.mubr.bf16.gmra.mrb[0].mxu0 %v75
  %v238 = vpop.f32.mrb[0].mxu0
  %v239 = vadd.f32 %v68, %v238
  %v240 = vpop.f32.mrb[0].mxu0
  %v241 = vpop.f32.mrb[0].mxu0
  %v242 = vpop.f32.mrb[0].mxu0
  %243 = vdwg.mxu0
  %244 = vmatprep.subr.bf16.mxu0 0
  %245 = vmatpush1.bf16.msra.mxu0 %v176
  %246 = vmatprep.subr.bf16.mxu0 0
  %247 = vmatpush1.bf16.msra.mxu0 %v177
  %248 = vmatprep.subr.bf16.mxu0 0
  %249 = vmatpush1.bf16.msra.mxu0 %v178
  %250 = vmatprep.subr.bf16.mxu0 0
  %251 = vmatpush1.bf16.msra.mxu0 %v179
  %252 = vmatprep.subr.bf16.mxu0 0
  %253 = vmatpush1.bf16.msra.mxu0 0
  %254 = vmatprep.subr.bf16.mxu0 0
  %255 = vmatpush1.bf16.msra.mxu0 0
  %256 = vmatprep.subr.bf16.mxu0 0
  %257 = vmatpush1.bf16.msra.mxu0 0
  %258 = vmatprep.subr.bf16.mxu0 0
  %259 = vmatpush1.bf16.msra.mxu0 0
  %260 = vmatprep.subr.bf16.mxu0 0
  %261 = vmatpush1.bf16.msra.mxu0 0
  %262 = vmatprep.subr.bf16.mxu0 0
  %263 = vmatpush1.bf16.msra.mxu0 0
  %264 = vmatprep.subr.bf16.mxu0 0
  %265 = vmatpush1.bf16.msra.mxu0 0
  %266 = vmatprep.subr.bf16.mxu0 0
  %267 = vmatpush1.bf16.msra.mxu0 0
  %268 = vmatprep.subr.bf16.mxu0 0
  %269 = vmatpush1.bf16.msra.mxu0 0
  %270 = vmatprep.subr.bf16.mxu0 0
  %271 = vmatpush1.bf16.msra.mxu0 0
  %272 = vmatprep.subr.bf16.mxu0 0
  %273 = vmatpush1.bf16.msra.mxu0 0
  %274 = vmatprep.subr.bf16.mxu0 0
  %275 = vmatpush1.bf16.msra.mxu0 0
  %276 = vmatprep.mubr.bf16.mxu0 0
  %277 = vmatmul.mubr.bf16.gmra.mrb[0].mxu0 %v202
  %v278 = vpop.f32.mrb[0].mxu0
  %v279 = vadd.f32 %v239, %v278
  %v280 = vpop.f32.mrb[0].mxu0
  %v281 = vpop.f32.mrb[0].mxu0
  %v282 = vpop.f32.mrb[0].mxu0
  %283 = vdwg.mxu0
  %v284 = vmax.f32 %v279, 0.0
  %v285 = vpack.c.bf16 %v284, %v284
  %v286 = vld [vmem:[%s3] sm:$0xf]
  %v287 = vld [vmem:[%s3 + $0x4] sm:$0xf]
  %v288 = vld [vmem:[%s3 + $0x8] sm:$0xf]
  %v289 = vld [vmem:[%s3 + $0xc] sm:$0xf]
  %v290 = vld [vmem:[%s3 + $0x10] sm:$0xf]
  %v291 = vld [vmem:[%s3 + $0x14] sm:$0xf]
  %v292 = vld [vmem:[%s3 + $0x18] sm:$0xf]
  %v293 = vld [vmem:[%s3 + $0x1c] sm:$0xf]
  %v294 = vld [vmem:[%s3 + $0x20] sm:$0xf]
  %v295 = vld [vmem:[%s3 + $0x24] sm:$0xf]
  %v296 = vld [vmem:[%s3 + $0x28] sm:$0xf]
  %v297 = vld [vmem:[%s3 + $0x2c] sm:$0xf]
  %v298 = vld [vmem:[%s3 + $0x30] sm:$0xf]
  %v299 = vld [vmem:[%s3 + $0x34] sm:$0xf]
  %v300 = vld [vmem:[%s3 + $0x38] sm:$0xf]
  %v301 = vld [vmem:[%s3 + $0x3c] sm:$0xf]
  %v302 = vld [vmem:[%s4] sm:$0x1]
  %v304 = vlaneseq
  %v305 = vshrl.u32 %v304, 7
  %v306 = vsub.s32 0, %v305
  %v307 = vrot.slane %v302, %v306
  %v325 = vunpack.c.l.b16 %v286
  %v326 = vunpack.c.l.b16 %v287
  %v327 = vunpack.c.l.b16 %v288
  %v328 = vunpack.c.l.b16 %v289
  %v329 = vunpack.c.l.b16 %v290
  %v330 = vunpack.c.l.b16 %v291
  %v331 = vunpack.c.l.b16 %v292
  %v332 = vunpack.c.l.b16 %v293
  %v333 = vunpack.c.l.b16 %v294
  %v334 = vunpack.c.l.b16 %v295
  %v335 = vunpack.c.l.b16 %v296
  %v336 = vunpack.c.l.b16 %v297
  %v337 = vunpack.c.l.b16 %v298
  %v338 = vunpack.c.l.b16 %v299
  %v339 = vunpack.c.l.b16 %v300
  %v340 = vunpack.c.l.b16 %v301
  %v341 = vpack.c.b16 %v326, %v325
  %v342 = vpack.c.b16 %v328, %v327
  %v343 = vpack.c.b16 %v330, %v329
  %v344 = vpack.c.b16 %v332, %v331
  %v345 = vpack.c.b16 %v334, %v333
  %v346 = vpack.c.b16 %v336, %v335
  %v347 = vpack.c.b16 %v338, %v337
  %v348 = vpack.c.b16 %v340, %v339
  %357 = vmatprep.subr.bf16.mxu0 0
  %358 = vmatpush1.bf16.msra.mxu0 %v341
  %359 = vmatprep.subr.bf16.mxu0 0
  %360 = vmatpush1.bf16.msra.mxu0 %v342
  %361 = vmatprep.subr.bf16.mxu0 0
  %362 = vmatpush1.bf16.msra.mxu0 %v343
  %363 = vmatprep.subr.bf16.mxu0 0
  %364 = vmatpush1.bf16.msra.mxu0 %v344
  %365 = vmatprep.subr.bf16.mxu0 0
  %366 = vmatpush1.bf16.msra.mxu0 %v345
  %367 = vmatprep.subr.bf16.mxu0 0
  %368 = vmatpush1.bf16.msra.mxu0 %v346
  %369 = vmatprep.subr.bf16.mxu0 0
  %370 = vmatpush1.bf16.msra.mxu0 %v347
  %371 = vmatprep.subr.bf16.mxu0 0
  %372 = vmatpush1.bf16.msra.mxu0 %v348
  %373 = vmatprep.subr.bf16.mxu0 0
  %374 = vmatpush1.bf16.msra.mxu0 0
  %375 = vmatprep.subr.bf16.mxu0 0
  %376 = vmatpush1.bf16.msra.mxu0 0
  %377 = vmatprep.subr.bf16.mxu0 0
  %378 = vmatpush1.bf16.msra.mxu0 0
  %379 = vmatprep.subr.bf16.mxu0 0
  %380 = vmatpush1.bf16.msra.mxu0 0
  %381 = vmatprep.subr.bf16.mxu0 0
  %382 = vmatpush1.bf16.msra.mxu0 0
  %383 = vmatprep.subr.bf16.mxu0 0
  %384 = vmatpush1.bf16.msra.mxu0 0
  %385 = vmatprep.subr.bf16.mxu0 0
  %386 = vmatpush1.bf16.msra.mxu0 0
  %387 = vmatprep.subr.bf16.mxu0 0
  %388 = vmatpush1.bf16.msra.mxu0 0
  %389 = vmatprep.mubr.bf16.mxu0 0
  %390 = vmatmul.mubr.bf16.gmra.mrb[0].mxu0 %v285
  %v391 = vpop.f32.mrb[0].mxu0
  %v392 = vadd.f32 %v307, %v391
  %v393 = vpop.f32.mrb[0].mxu0
  %v394 = vpop.f32.mrb[0].mxu0
  %v395 = vpop.f32.mrb[0].mxu0
  %396 = vdwg.mxu0
  %397 = vst [vmem:[%s5] sm:$0xff] %v392
  // Predicated region
  $region22: #{simple_cnn_forward.5} parent=0 // pred_check
    _
  $region23: #{simple_cnn_forward.5} parent=0 // pred_check_branch
    %399 = sbr.rel (0) target = $region25
  $region24: #{simple_cnn_forward.5} parent=0 // pred_region
    _
  $region25: #{simple_cnn_forward.5} parent=0 // pred_fallthru
    _
  // Predicated region
  $region26: #{simple_cnn_forward.5} parent=0 // pred_check
    _
  $region27: #{simple_cnn_forward.5} parent=0 // pred_check_branch
    %401 = sbr.rel (0) target = $region29
  $region28: #{simple_cnn_forward.5} parent=0 // pred_region
    _
  $region29: #{simple_cnn_forward.5} parent=0 // pred_fallthru
    _

</llo_original>
